<compile_context>
chip_gen: v5e
topology: v5e:2x2
jax: 0.10.0
libtpu: 0.0.40
codegen_flags: <defaults>
</compile_context>

<pallas_src>
import functools

import jax
import jax.numpy as jnp
import numpy as np
from jax.experimental import pallas as pl
from jax.experimental.pallas import tpu as pltpu

NUM_CLASSES = 26 + 10 + 1  # 37


# --------------------------------------------------------------------------
# Fused kernel: conv+pool -> BiLSTM -> FC + log_softmax
# --------------------------------------------------------------------------
def crnn_fused_kernel(p_ref, wconv_ref, bconv_ref, wih_ref, gb_ref, whh_ref,
                      fcw_ref, fcb_ref, o_ref, hf_acc, hb_acc, *, B, T, H):
    # p_ref:     (4, T, B, Hc*9) bf16   4 = 2x2 pool candidates
    # wconv_ref: (Hc*9, F) bf16         block-diagonal im2col conv weight
    # bconv_ref: (1, F) f32
    # wih_ref:   (F, 8H) bf16           [wih_f.T | wih_b.T]
    # gb_ref:    (1, 8H) f32            [bih_f+bhh_f | bih_b+bhh_b]
    # whh_ref:   (H, 8H) f32            [whh_f.T | whh_b.T]
    # fcw_ref:   (2H, NCP) f32          classes padded to 128 lanes
    # fcb_ref:   (1, NCP) f32           padded lanes = -1e30
    # o_ref:     (T, B, NCP) f32
    # hf_acc/hb_acc: (T*B, H) f32 VMEM scratch
    HK = p_ref.shape[-1]
    F = wconv_ref.shape[-1]
    TB = T * B
    NCP = fcw_ref.shape[-1]

    # ---- conv 3x3 + 2x2 max-pool + bias + ReLU: one matmul + 4-way max ----
    pm = p_ref[...].reshape(4 * TB, HK)                         # (4*T*B, Hc*9)
    y = jnp.dot(pm, wconv_ref[...], preferred_element_type=jnp.float32)
    y = y.reshape(4, TB, F)
    y = jnp.maximum(jnp.maximum(y[0], y[1]), jnp.maximum(y[2], y[3]))
    # bias + ReLU hoisted past the pool max (monotone, bias constant per tap)
    x2 = jnp.maximum(y + bconv_ref[...], 0.0)                   # (T*B, F) f32

    # ---- one fused input projection for both LSTM directions ----
    xg = jnp.dot(x2.astype(jnp.bfloat16), wih_ref[...],
                 preferred_element_type=jnp.float32) + gb_ref[...]   # (T*B, 8H)
    xgf = xg[:, 0:4 * H]                                        # lane-128 split
    xgb = xg[:, 4 * H:8 * H]

    whh = whh_ref[...]                                          # (H, 8H) f32

    # hoisted masks (computed once; JAX does not CSE broadcast_in_dim)
    row = jax.lax.broadcasted_iota(jnp.int32, (2 * B, 4 * H), 0)
    fwd_row = row < B                                           # fwd rows / bwd rows
    lane = jax.lax.broadcasted_iota(jnp.int32, (2 * B, 4 * H), 1)
    g_gate = (lane >= 2 * H) & (lane < 3 * H)                   # tanh gate lanes

    h_both = jnp.zeros((2 * B, H), jnp.float32)                 # [hf ; hb] on sublanes
    c_both = jnp.zeros((2 * B, H), jnp.float32)

    # static unroll: one recurrent matmul + one cell() per step for BOTH dirs
    for s in range(T):
        tb = T - 1 - s
        xg_s = jnp.concatenate([xgf[s * B:(s + 1) * B, :],
                                xgb[tb * B:(tb + 1) * B, :]], axis=0)  # (2B, 4H)
        if s == 0:
            g = xg_s                                            # h == 0: skip matmul
        else:
            rec = jnp.dot(h_both, whh, preferred_element_type=jnp.float32)  # (2B, 8H)
            g = xg_s + jnp.where(fwd_row, rec[:, 0:4 * H], rec[:, 4 * H:8 * H])
        # full-vreg nonlinearities, one sigmoid + one tanh, combined by mask
        act = jnp.where(g_gate, jnp.tanh(g), jax.nn.sigmoid(g))
        i_g = act[:, 0:H]
        f_g = act[:, H:2 * H]
        g_g = act[:, 2 * H:3 * H]
        o_g = act[:, 3 * H:4 * H]
        c_both = f_g * c_both + i_g * g_g
        h_both = o_g * jnp.tanh(c_both)
        # cheap per-step VMEM scratch writes (not HBM partial output stores)
        hf_acc[s * B:(s + 1) * B, :] = h_both[0:B, :]
        hb_acc[tb * B:(tb + 1) * B, :] = h_both[B:2 * B, :]

    # ---- FC (split over the two directions, no lane concat) + log_softmax ----
    logits = (jnp.dot(hf_acc[...], fcw_ref[0:H, :], preferred_element_type=jnp.float32)
              + jnp.dot(hb_acc[...], fcw_ref[H:2 * H, :], preferred_element_type=jnp.float32)
              + fcb_ref[...])                                   # (T*B, NCP)
    m = jnp.max(logits, axis=-1, keepdims=True)                 # padded lanes = -1e30
    sh = logits - m
    lse = jnp.log(jnp.sum(jnp.exp(sh), axis=-1, keepdims=True))
    o_ref[...] = (sh - lse).reshape(T, B, NCP)


# --------------------------------------------------------------------------
# Wrapper (padding / im2col / weight re-layout / batch-parallel grid)
# --------------------------------------------------------------------------
def crnn_forward(x, params, *, block_b=None):
    B, _, Hin, Win = x.shape
    Hc, Wc = Hin // 2, Win // 2
    T = Wc
    F = 64 * Hc
    H = params["whh_f"].shape[1]
    nc = params["fc_w"].shape[0]
    NCP = 128  # lane-dense padded class dim
    assert F == params["wih_f"].shape[1]

    if block_b is None:
        block_b = B if B <= 8 else 8
    if B % block_b != 0:
        block_b = B
    grid = (B // block_b,)

    # im2col patches: (4 pool candidates, T, B, Hc*9), bf16
    xp = jnp.pad(x[:, 0], ((0, 0), (1, 1), (1, 1)))             # SAME pad for 3x3
    pat = jnp.stack([xp[:, di:di + Hin, dj:dj + Win]
                     for di in range(3) for dj in range(3)], axis=-1)  # (B,H,W,9)
    pat = pat.reshape(B, Hc, 2, Wc, 2, 9)                       # (b, hp, ph, wp, pw, k)
    pat = jnp.transpose(pat, (2, 4, 3, 0, 1, 5))                # (ph, pw, wp, b, hp, k)
    patches = pat.reshape(4, T, B, Hc * 9).astype(jnp.bfloat16)

    # block-diagonal conv weight over Hc + tiled bias
    w9 = params["conv_w"].reshape(64, 9).T                      # (9, 64)
    wconv = jnp.kron(jnp.eye(Hc, dtype=jnp.float32), w9).astype(jnp.bfloat16)
    bconv = jnp.tile(params["conv_b"], Hc).reshape(1, F).astype(jnp.float32)

    # fused input-projection weight / gate bias for both directions
    wih = jnp.concatenate([params["wih_f"].T, params["wih_b"].T],
                          axis=1).astype(jnp.bfloat16)          # (F, 8H)
    gb = jnp.concatenate([params["bih_f"] + params["bhh_f"],
                          params["bih_b"] + params["bhh_b"]]).reshape(1, 8 * H)

    # fused recurrent weight (stays f32: it sits on the serial vreg path)
    whh = jnp.concatenate([params["whh_f"].T, params["whh_b"].T], axis=1)  # (H, 8H)

    # lane-dense FC: pad classes to 128; padded bias lanes -> -1e30
    fcw = jnp.zeros((2 * H, NCP), jnp.float32).at[:, :nc].set(params["fc_w"].T)
    fcb = jnp.full((1, NCP), -1e30, jnp.float32).at[0, :nc].set(params["fc_b"])

    out = pl.pallas_call(
        functools.partial(crnn_fused_kernel, B=block_b, T=T, H=H),
        grid=grid,
        out_shape=jax.ShapeDtypeStruct((T, B, NCP), jnp.float32),
        in_specs=[
            pl.BlockSpec((4, T, block_b, Hc * 9), lambda i: (0, 0, i, 0)),
            pl.BlockSpec(wconv.shape, lambda i: (0, 0)),
            pl.BlockSpec(bconv.shape, lambda i: (0, 0)),
            pl.BlockSpec(wih.shape, lambda i: (0, 0)),
            pl.BlockSpec(gb.shape, lambda i: (0, 0)),
            pl.BlockSpec(whh.shape, lambda i: (0, 0)),
            pl.BlockSpec(fcw.shape, lambda i: (0, 0)),
            pl.BlockSpec(fcb.shape, lambda i: (0, 0)),
        ],
        out_specs=pl.BlockSpec((T, block_b, NCP), lambda i: (0, i, 0)),
        scratch_shapes=[pltpu.VMEM((T * block_b, H), jnp.float32),
                        pltpu.VMEM((T * block_b, H), jnp.float32)],
        compiler_params=pltpu.CompilerParams(dimension_semantics=("parallel",)),
    )(patches, wconv, bconv, wih, gb, whh, fcw, fcb)

    # (T, B, nc) == permute(1,0,2) of the module's (B, T, nc)
    return out[:, :, :nc]


# --------------------------------------------------------------------------
# Pure-JAX reference (for correctness check)
# --------------------------------------------------------------------------
def crnn_reference(x, params, hidden_size):
    B = x.shape[0]
    y = jax.lax.conv_general_dilated(
        x, params["conv_w"], window_strides=(1, 1), padding="SAME",
        dimension_numbers=("NCHW", "OIHW", "NCHW"))
    y = y + params["conv_b"][None, :, None, None]
    y = jnp.maximum(y, 0.0)
    Bc, C, Hh_, W = y.shape
    y = y.reshape(Bc, C, Hh_ // 2, 2, W // 2, 2).max(axis=(3, 5))
    z = jnp.transpose(y, (0, 3, 2, 1)).reshape(B, W // 2, -1)

    Hh = hidden_size

    def run_dir(wih, whh, bih, bhh, reverse):
        xs = jnp.transpose(z, (1, 0, 2))
        if reverse:
            xs = xs[::-1]

        def step(carry, xt):
            h, c = carry
            g = xt @ wih.T + bih + h @ whh.T + bhh
            i = jax.nn.sigmoid(g[:, :Hh])
            f = jax.nn.sigmoid(g[:, Hh:2 * Hh])
            gg = jnp.tanh(g[:, 2 * Hh:3 * Hh])
            o = jax.nn.sigmoid(g[:, 3 * Hh:])
            c = f * c + i * gg
            h = o * jnp.tanh(c)
            return (h, c), h

        init = (jnp.zeros((B, Hh), jnp.float32), jnp.zeros((B, Hh), jnp.float32))
        _, hs = jax.lax.scan(step, init, xs)
        if reverse:
            hs = hs[::-1]
        return jnp.transpose(hs, (1, 0, 2))

    hf = run_dir(params["wih_f"], params["whh_f"], params["bih_f"], params["bhh_f"], False)
    hb = run_dir(params["wih_b"], params["whh_b"], params["bih_b"], params["bhh_b"], True)
    h = jnp.concatenate([hf, hb], axis=-1)
    logits = h @ params["fc_w"].T + params["fc_b"]
    out = jnp.transpose(logits, (1, 0, 2))
    return jax.nn.log_softmax(out, axis=2)


# --------------------------------------------------------------------------
# Deterministic parameter init (shapes match the PyTorch module)
# --------------------------------------------------------------------------
def init_params(key, input_height, hidden_size, num_classes):
    F = 64 * (input_height // 2)
    ks = jax.random.split(key, 12)
    s = 0.05
    n = lambda k, shp: jax.random.normal(k, shp, jnp.float32) * s
    return {
        "conv_w": n(ks[0], (64, 1, 3, 3)),
        "conv_b": n(ks[1], (64,)),
        "wih_f": n(ks[2], (4 * hidden_size, F)),
        "whh_f": n(ks[3], (4 * hidden_size, hidden_size)),
        "bih_f": n(ks[4], (4 * hidden_size,)),
        "bhh_f": n(ks[5], (4 * hidden_size,)),
        "wih_b": n(ks[6], (4 * hidden_size, F)),
        "whh_b": n(ks[7], (4 * hidden_size, hidden_size)),
        "bih_b": n(ks[8], (4 * hidden_size,)),
        "bhh_b": n(ks[9], (4 * hidden_size,)),
        "fc_w": n(ks[10], (num_classes, 2 * hidden_size)),
        "fc_b": n(ks[11], (num_classes,)),
    }


if __name__ == "__main__":
    input_height, input_width = 16, 16
    hidden_size = 32
    batch = 2

    key = jax.random.PRNGKey(0)
    kx, kp = jax.random.split(key)
    x = jax.random.normal(kx, (batch, 1, input_height, input_width), jnp.float32)
    params = init_params(kp, input_height, hidden_size, NUM_CLASSES)

    out = jax.jit(crnn_forward)(x, params)
    out = jax.block_until_ready(out)
    assert out.shape == (input_width // 2, batch, NUM_CLASSES), out.shape

    ref = crnn_reference(x, params, hidden_size)
    np.testing.assert_allclose(np.asarray(out), np.asarray(ref), rtol=1e-2, atol=3e-3)

    print("KERNEL_OK")
</pallas_src>

<mosaic_0001>
module attributes {stable_mosaic.version = 11 : i64} {
  func.func @crnn_fused_kernel(%arg0: i32, %arg1: memref<4x8x2x72xbf16, #tpu.memory_space<vmem>>, %arg2: memref<72x512xbf16, #tpu.memory_space<vmem>>, %arg3: memref<1x512xf32, #tpu.memory_space<vmem>>, %arg4: memref<512x256xbf16, #tpu.memory_space<vmem>>, %arg5: memref<1x256xf32, #tpu.memory_space<vmem>>, %arg6: memref<32x256xf32, #tpu.memory_space<vmem>>, %arg7: memref<64x128xf32, #tpu.memory_space<vmem>>, %arg8: memref<1x128xf32, #tpu.memory_space<vmem>>, %arg9: memref<8x2x128xf32, #tpu.memory_space<vmem>>, %arg10: memref<16x32xf32, #tpu.memory_space<vmem>>, %arg11: memref<16x32xf32, #tpu.memory_space<vmem>>) attributes {dimension_semantics = [#tpu.dimension_semantics<parallel>], iteration_bounds = array<i64: 1>, scalar_prefetch = 0 : i64, scratch_operands = 2 : i64, tpu.core_type = #tpu.core_type<tc>, window_params = [{transform_indices = @transform_0, window_bounds = array<i64: 4, 8, 2, 72>}, {pipeline_mode = #tpu.pipeline_mode<synchronous>, transform_indices = @transform_1, window_bounds = array<i64: 72, 512>}, {pipeline_mode = #tpu.pipeline_mode<synchronous>, transform_indices = @transform_2, window_bounds = array<i64: 1, 512>}, {pipeline_mode = #tpu.pipeline_mode<synchronous>, transform_indices = @transform_3, window_bounds = array<i64: 512, 256>}, {pipeline_mode = #tpu.pipeline_mode<synchronous>, transform_indices = @transform_4, window_bounds = array<i64: 1, 256>}, {pipeline_mode = #tpu.pipeline_mode<synchronous>, transform_indices = @transform_5, window_bounds = array<i64: 32, 256>}, {pipeline_mode = #tpu.pipeline_mode<synchronous>, transform_indices = @transform_6, window_bounds = array<i64: 64, 128>}, {pipeline_mode = #tpu.pipeline_mode<synchronous>, transform_indices = @transform_7, window_bounds = array<i64: 1, 128>}, {transform_indices = @transform_8, window_bounds = array<i64: 8, 2, 128>}]} {
    %c0 = arith.constant 0 : index
    %c0_0 = arith.constant 0 : index
    %c0_1 = arith.constant 0 : index
    %c0_2 = arith.constant 0 : index
    %0 = vector.load %arg1[%c0, %c0_0, %c0_1, %c0_2] : memref<4x8x2x72xbf16, #tpu.memory_space<vmem>>, vector<4x8x2x72xbf16>
    %1 = vector.shape_cast %0 : vector<4x8x2x72xbf16> to vector<64x72xbf16>
    %c0_3 = arith.constant 0 : index
    %c0_4 = arith.constant 0 : index
    %2 = vector.load %arg2[%c0_3, %c0_4] : memref<72x512xbf16, #tpu.memory_space<vmem>>, vector<72x512xbf16>
    %cst = arith.constant dense<0.000000e+00> : vector<64x512xf32>
    %3 = tpu.matmul %1, %2, %cst {dimension_numbers = #tpu.dot_dimension_numbers<[1], [0], [0], [1], [0, 0, 1, 1], [], []>} : vector<64x72xbf16>, vector<72x512xbf16>, vector<64x512xf32> -> vector<64x512xf32>
    %4 = vector.shape_cast %3 : vector<64x512xf32> to vector<4x16x512xf32>
    %5 = vector.extract_strided_slice %4 {offsets = [0, 0, 0], sizes = [1, 16, 512], strides = [1, 1, 1]} : vector<4x16x512xf32> to vector<1x16x512xf32>
    %6 = vector.shape_cast %5 : vector<1x16x512xf32> to vector<16x512xf32>
    %7 = vector.extract_strided_slice %4 {offsets = [1, 0, 0], sizes = [1, 16, 512], strides = [1, 1, 1]} : vector<4x16x512xf32> to vector<1x16x512xf32>
    %8 = vector.shape_cast %7 : vector<1x16x512xf32> to vector<16x512xf32>
    %9 = arith.maximumf %6, %8 : vector<16x512xf32>
    %10 = vector.extract_strided_slice %4 {offsets = [2, 0, 0], sizes = [1, 16, 512], strides = [1, 1, 1]} : vector<4x16x512xf32> to vector<1x16x512xf32>
    %11 = vector.shape_cast %10 : vector<1x16x512xf32> to vector<16x512xf32>
    %12 = vector.extract_strided_slice %4 {offsets = [3, 0, 0], sizes = [1, 16, 512], strides = [1, 1, 1]} : vector<4x16x512xf32> to vector<1x16x512xf32>
    %13 = vector.shape_cast %12 : vector<1x16x512xf32> to vector<16x512xf32>
    %14 = arith.maximumf %11, %13 : vector<16x512xf32>
    %15 = arith.maximumf %9, %14 : vector<16x512xf32>
    %c0_5 = arith.constant 0 : index
    %c0_6 = arith.constant 0 : index
    %16 = vector.load %arg3[%c0_5, %c0_6] : memref<1x512xf32, #tpu.memory_space<vmem>>, vector<1x512xf32>
    %17 = vector.broadcast %16 : vector<1x512xf32> to vector<16x512xf32>
    %18 = arith.addf %15, %17 : vector<16x512xf32>
    %cst_7 = arith.constant 0.000000e+00 : f32
    %19 = vector.broadcast %cst_7 : f32 to vector<16x512xf32>
    %20 = arith.maximumf %18, %19 : vector<16x512xf32>
    %21 = arith.truncf %20 : vector<16x512xf32> to vector<16x512xbf16>
    %c0_8 = arith.constant 0 : index
    %c0_9 = arith.constant 0 : index
    %22 = vector.load %arg4[%c0_8, %c0_9] : memref<512x256xbf16, #tpu.memory_space<vmem>>, vector<512x256xbf16>
    %cst_10 = arith.constant dense<0.000000e+00> : vector<16x256xf32>
    %23 = tpu.matmul %21, %22, %cst_10 {dimension_numbers = #tpu.dot_dimension_numbers<[1], [0], [0], [1], [0, 0, 1, 1], [], []>} : vector<16x512xbf16>, vector<512x256xbf16>, vector<16x256xf32> -> vector<16x256xf32>
    %c0_11 = arith.constant 0 : index
    %c0_12 = arith.constant 0 : index
    %24 = vector.load %arg5[%c0_11, %c0_12] : memref<1x256xf32, #tpu.memory_space<vmem>>, vector<1x256xf32>
    %25 = vector.broadcast %24 : vector<1x256xf32> to vector<16x256xf32>
    %26 = arith.addf %23, %25 : vector<16x256xf32>
    %27 = vector.extract_strided_slice %26 {offsets = [0, 0], sizes = [16, 128], strides = [1, 1]} : vector<16x256xf32> to vector<16x128xf32>
    %28 = vector.extract_strided_slice %26 {offsets = [0, 128], sizes = [16, 128], strides = [1, 1]} : vector<16x256xf32> to vector<16x128xf32>
    %c0_13 = arith.constant 0 : index
    %c0_14 = arith.constant 0 : index
    %29 = vector.load %arg6[%c0_13, %c0_14] : memref<32x256xf32, #tpu.memory_space<vmem>>, vector<32x256xf32>
    %30 = tpu.iota {dimensions = array<i32: 0>} : vector<4x128xi32>
    %c2_i32 = arith.constant 2 : i32
    %31 = vector.broadcast %c2_i32 : i32 to vector<4x128xi32>
    %32 = arith.cmpi slt, %30, %31 : vector<4x128xi32>
    %33 = tpu.iota {dimensions = array<i32: 1>} : vector<4x128xi32>
    %c64_i32 = arith.constant 64 : i32
    %34 = vector.broadcast %c64_i32 : i32 to vector<4x128xi32>
    %35 = arith.cmpi sge, %33, %34 : vector<4x128xi32>
    %c96_i32 = arith.constant 96 : i32
    %36 = vector.broadcast %c96_i32 : i32 to vector<4x128xi32>
    %37 = arith.cmpi slt, %33, %36 : vector<4x128xi32>
    %38 = arith.andi %35, %37 : vector<4x128xi1>
    %cst_15 = arith.constant 0.000000e+00 : f32
    %39 = vector.broadcast %cst_15 : f32 to vector<4x32xf32>
    %40 = vector.extract_strided_slice %27 {offsets = [0, 0], sizes = [2, 128], strides = [1, 1]} : vector<16x128xf32> to vector<2x128xf32>
    %41 = vector.extract_strided_slice %28 {offsets = [14, 0], sizes = [2, 128], strides = [1, 1]} : vector<16x128xf32> to vector<2x128xf32>
    %42 = tpu.concatenate %40, %41 in 0 : vector<2x128xf32>, vector<2x128xf32> -> vector<4x128xf32>
    %43 = math.tanh %42 : vector<4x128xf32>
    %44 = arith.negf %42 : vector<4x128xf32>
    %45 = math.exp %44 : vector<4x128xf32>
    %cst_16 = arith.constant 1.000000e+00 : f32
    %46 = vector.broadcast %cst_16 : f32 to vector<4x128xf32>
    %47 = arith.addf %46, %45 : vector<4x128xf32>
    %48 = arith.divf %46, %47 : vector<4x128xf32>
    %49 = arith.select %38, %43, %48 : vector<4x128xi1>, vector<4x128xf32>
    %50 = vector.extract_strided_slice %49 {offsets = [0, 0], sizes = [4, 32], strides = [1, 1]} : vector<4x128xf32> to vector<4x32xf32>
    %51 = vector.extract_strided_slice %49 {offsets = [0, 32], sizes = [4, 32], strides = [1, 1]} : vector<4x128xf32> to vector<4x32xf32>
    %52 = vector.extract_strided_slice %49 {offsets = [0, 64], sizes = [4, 32], strides = [1, 1]} : vector<4x128xf32> to vector<4x32xf32>
    %53 = vector.extract_strided_slice %49 {offsets = [0, 96], sizes = [4, 32], strides = [1, 1]} : vector<4x128xf32> to vector<4x32xf32>
    %54 = arith.mulf %51, %39 : vector<4x32xf32>
    %55 = arith.mulf %50, %52 : vector<4x32xf32>
    %56 = arith.addf %54, %55 : vector<4x32xf32>
    %57 = math.tanh %56 : vector<4x32xf32>
    %58 = arith.mulf %53, %57 : vector<4x32xf32>
    %59 = vector.extract_strided_slice %58 {offsets = [0, 0], sizes = [2, 32], strides = [1, 1]} : vector<4x32xf32> to vector<2x32xf32>
    %c0_17 = arith.constant 0 : index
    %c0_18 = arith.constant 0 : index
    %60 = vector.load %arg10[%c0_17, %c0_18] : memref<16x32xf32, #tpu.memory_space<vmem>>, vector<2x32xf32>
    tpu.vector_store %arg10[%c0_17, %c0_18], %59 {strides = array<i32>} : memref<16x32xf32, #tpu.memory_space<vmem>>, vector<2x32xf32>,
    %61 = vector.extract_strided_slice %58 {offsets = [2, 0], sizes = [2, 32], strides = [1, 1]} : vector<4x32xf32> to vector<2x32xf32>
    %c14 = arith.constant 14 : index
    %c0_19 = arith.constant 0 : index
    %62 = vector.load %arg11[%c14, %c0_19] : memref<16x32xf32, #tpu.memory_space<vmem>>, vector<2x32xf32>
    tpu.vector_store %arg11[%c14, %c0_19], %61 {strides = array<i32>} : memref<16x32xf32, #tpu.memory_space<vmem>>, vector<2x32xf32>,
    %63 = vector.extract_strided_slice %27 {offsets = [2, 0], sizes = [2, 128], strides = [1, 1]} : vector<16x128xf32> to vector<2x128xf32>
    %64 = vector.extract_strided_slice %28 {offsets = [12, 0], sizes = [2, 128], strides = [1, 1]} : vector<16x128xf32> to vector<2x128xf32>
    %65 = tpu.concatenate %63, %64 in 0 : vector<2x128xf32>, vector<2x128xf32> -> vector<4x128xf32>
    %cst_20 = arith.constant dense<0.000000e+00> : vector<4x256xf32>
    %66 = tpu.matmul %58, %29, %cst_20 {dimension_numbers = #tpu.dot_dimension_numbers<[1], [0], [0], [1], [0, 0, 1, 1], [], []>} : vector<4x32xf32>, vector<32x256xf32>, vector<4x256xf32> -> vector<4x256xf32>
    %67 = vector.extract_strided_slice %66 {offsets = [0, 0], sizes = [4, 128], strides = [1, 1]} : vector<4x256xf32> to vector<4x128xf32>
    %68 = vector.extract_strided_slice %66 {offsets = [0, 128], sizes = [4, 128], strides = [1, 1]} : vector<4x256xf32> to vector<4x128xf32>
    %69 = arith.select %32, %67, %68 : vector<4x128xi1>, vector<4x128xf32>
    %70 = arith.addf %65, %69 : vector<4x128xf32>
    %71 = math.tanh %70 : vector<4x128xf32>
    %72 = arith.negf %70 : vector<4x128xf32>
    %73 = math.exp %72 : vector<4x128xf32>
    %cst_21 = arith.constant 1.000000e+00 : f32
    %74 = vector.broadcast %cst_21 : f32 to vector<4x128xf32>
    %75 = arith.addf %74, %73 : vector<4x128xf32>
    %76 = arith.divf %74, %75 : vector<4x128xf32>
    %77 = arith.select %38, %71, %76 : vector<4x128xi1>, vector<4x128xf32>
    %78 = vector.extract_strided_slice %77 {offsets = [0, 0], sizes = [4, 32], strides = [1, 1]} : vector<4x128xf32> to vector<4x32xf32>
    %79 = vector.extract_strided_slice %77 {offsets = [0, 32], sizes = [4, 32], strides = [1, 1]} : vector<4x128xf32> to vector<4x32xf32>
    %80 = vector.extract_strided_slice %77 {offsets = [0, 64], sizes = [4, 32], strides = [1, 1]} : vector<4x128xf32> to vector<4x32xf32>
    %81 = vector.extract_strided_slice %77 {offsets = [0, 96], sizes = [4, 32], strides = [1, 1]} : vector<4x128xf32> to vector<4x32xf32>
    %82 = arith.mulf %79, %56 : vector<4x32xf32>
    %83 = arith.mulf %78, %80 : vector<4x32xf32>
    %84 = arith.addf %82, %83 : vector<4x32xf32>
    %85 = math.tanh %84 : vector<4x32xf32>
    %86 = arith.mulf %81, %85 : vector<4x32xf32>
    %87 = vector.extract_strided_slice %86 {offsets = [0, 0], sizes = [2, 32], strides = [1, 1]} : vector<4x32xf32> to vector<2x32xf32>
    %c2 = arith.constant 2 : index
    %c0_22 = arith.constant 0 : index
    %88 = vector.load %arg10[%c2, %c0_22] : memref<16x32xf32, #tpu.memory_space<vmem>>, vector<2x32xf32>
    tpu.vector_store %arg10[%c2, %c0_22], %87 {strides = array<i32>} : memref<16x32xf32, #tpu.memory_space<vmem>>, vector<2x32xf32>,
    %89 = vector.extract_strided_slice %86 {offsets = [2, 0], sizes = [2, 32], strides = [1, 1]} : vector<4x32xf32> to vector<2x32xf32>
    %c12 = arith.constant 12 : index
    %c0_23 = arith.constant 0 : index
    %90 = vector.load %arg11[%c12, %c0_23] : memref<16x32xf32, #tpu.memory_space<vmem>>, vector<2x32xf32>
    tpu.vector_store %arg11[%c12, %c0_23], %89 {strides = array<i32>} : memref<16x32xf32, #tpu.memory_space<vmem>>, vector<2x32xf32>,
    %91 = vector.extract_strided_slice %27 {offsets = [4, 0], sizes = [2, 128], strides = [1, 1]} : vector<16x128xf32> to vector<2x128xf32>
    %92 = vector.extract_strided_slice %28 {offsets = [10, 0], sizes = [2, 128], strides = [1, 1]} : vector<16x128xf32> to vector<2x128xf32>
    %93 = tpu.concatenate %91, %92 in 0 : vector<2x128xf32>, vector<2x128xf32> -> vector<4x128xf32>
    %cst_24 = arith.constant dense<0.000000e+00> : vector<4x256xf32>
    %94 = tpu.matmul %86, %29, %cst_24 {dimension_numbers = #tpu.dot_dimension_numbers<[1], [0], [0], [1], [0, 0, 1, 1], [], []>} : vector<4x32xf32>, vector<32x256xf32>, vector<4x256xf32> -> vector<4x256xf32>
    %95 = vector.extract_strided_slice %94 {offsets = [0, 0], sizes = [4, 128], strides = [1, 1]} : vector<4x256xf32> to vector<4x128xf32>
    %96 = vector.extract_strided_slice %94 {offsets = [0, 128], sizes = [4, 128], strides = [1, 1]} : vector<4x256xf32> to vector<4x128xf32>
    %97 = arith.select %32, %95, %96 : vector<4x128xi1>, vector<4x128xf32>
    %98 = arith.addf %93, %97 : vector<4x128xf32>
    %99 = math.tanh %98 : vector<4x128xf32>
    %100 = arith.negf %98 : vector<4x128xf32>
    %101 = math.exp %100 : vector<4x128xf32>
    %cst_25 = arith.constant 1.000000e+00 : f32
    %102 = vector.broadcast %cst_25 : f32 to vector<4x128xf32>
    %103 = arith.addf %102, %101 : vector<4x128xf32>
    %104 = arith.divf %102, %103 : vector<4x128xf32>
    %105 = arith.select %38, %99, %104 : vector<4x128xi1>, vector<4x128xf32>
    %106 = vector.extract_strided_slice %105 {offsets = [0, 0], sizes = [4, 32], strides = [1, 1]} : vector<4x128xf32> to vector<4x32xf32>
    %107 = vector.extract_strided_slice %105 {offsets = [0, 32], sizes = [4, 32], strides = [1, 1]} : vector<4x128xf32> to vector<4x32xf32>
    %108 = vector.extract_strided_slice %105 {offsets = [0, 64], sizes = [4, 32], strides = [1, 1]} : vector<4x128xf32> to vector<4x32xf32>
    %109 = vector.extract_strided_slice %105 {offsets = [0, 96], sizes = [4, 32], strides = [1, 1]} : vector<4x128xf32> to vector<4x32xf32>
    %110 = arith.mulf %107, %84 : vector<4x32xf32>
    %111 = arith.mulf %106, %108 : vector<4x32xf32>
    %112 = arith.addf %110, %111 : vector<4x32xf32>
    %113 = math.tanh %112 : vector<4x32xf32>
    %114 = arith.mulf %109, %113 : vector<4x32xf32>
    %115 = vector.extract_strided_slice %114 {offsets = [0, 0], sizes = [2, 32], strides = [1, 1]} : vector<4x32xf32> to vector<2x32xf32>
    %c4 = arith.constant 4 : index
    %c0_26 = arith.constant 0 : index
    %116 = vector.load %arg10[%c4, %c0_26] : memref<16x32xf32, #tpu.memory_space<vmem>>, vector<2x32xf32>
    tpu.vector_store %arg10[%c4, %c0_26], %115 {strides = array<i32>} : memref<16x32xf32, #tpu.memory_space<vmem>>, vector<2x32xf32>,
    %117 = vector.extract_strided_slice %114 {offsets = [2, 0], sizes = [2, 32], strides = [1, 1]} : vector<4x32xf32> to vector<2x32xf32>
    %c10 = arith.constant 10 : index
    %c0_27 = arith.constant 0 : index
    %118 = vector.load %arg11[%c10, %c0_27] : memref<16x32xf32, #tpu.memory_space<vmem>>, vector<2x32xf32>
    tpu.vector_store %arg11[%c10, %c0_27], %117 {strides = array<i32>} : memref<16x32xf32, #tpu.memory_space<vmem>>, vector<2x32xf32>,
    %119 = vector.extract_strided_slice %27 {offsets = [6, 0], sizes = [2, 128], strides = [1, 1]} : vector<16x128xf32> to vector<2x128xf32>
    %120 = vector.extract_strided_slice %28 {offsets = [8, 0], sizes = [2, 128], strides = [1, 1]} : vector<16x128xf32> to vector<2x128xf32>
    %121 = tpu.concatenate %119, %120 in 0 : vector<2x128xf32>, vector<2x128xf32> -> vector<4x128xf32>
    %cst_28 = arith.constant dense<0.000000e+00> : vector<4x256xf32>
    %122 = tpu.matmul %114, %29, %cst_28 {dimension_numbers = #tpu.dot_dimension_numbers<[1], [0], [0], [1], [0, 0, 1, 1], [], []>} : vector<4x32xf32>, vector<32x256xf32>, vector<4x256xf32> -> vector<4x256xf32>
    %123 = vector.extract_strided_slice %122 {offsets = [0, 0], sizes = [4, 128], strides = [1, 1]} : vector<4x256xf32> to vector<4x128xf32>
    %124 = vector.extract_strided_slice %122 {offsets = [0, 128], sizes = [4, 128], strides = [1, 1]} : vector<4x256xf32> to vector<4x128xf32>
    %125 = arith.select %32, %123, %124 : vector<4x128xi1>, vector<4x128xf32>
    %126 = arith.addf %121, %125 : vector<4x128xf32>
    %127 = math.tanh %126 : vector<4x128xf32>
    %128 = arith.negf %126 : vector<4x128xf32>
    %129 = math.exp %128 : vector<4x128xf32>
    %cst_29 = arith.constant 1.000000e+00 : f32
    %130 = vector.broadcast %cst_29 : f32 to vector<4x128xf32>
    %131 = arith.addf %130, %129 : vector<4x128xf32>
    %132 = arith.divf %130, %131 : vector<4x128xf32>
    %133 = arith.select %38, %127, %132 : vector<4x128xi1>, vector<4x128xf32>
    %134 = vector.extract_strided_slice %133 {offsets = [0, 0], sizes = [4, 32], strides = [1, 1]} : vector<4x128xf32> to vector<4x32xf32>
    %135 = vector.extract_strided_slice %133 {offsets = [0, 32], sizes = [4, 32], strides = [1, 1]} : vector<4x128xf32> to vector<4x32xf32>
    %136 = vector.extract_strided_slice %133 {offsets = [0, 64], sizes = [4, 32], strides = [1, 1]} : vector<4x128xf32> to vector<4x32xf32>
    %137 = vector.extract_strided_slice %133 {offsets = [0, 96], sizes = [4, 32], strides = [1, 1]} : vector<4x128xf32> to vector<4x32xf32>
    %138 = arith.mulf %135, %112 : vector<4x32xf32>
    %139 = arith.mulf %134, %136 : vector<4x32xf32>
    %140 = arith.addf %138, %139 : vector<4x32xf32>
    %141 = math.tanh %140 : vector<4x32xf32>
    %142 = arith.mulf %137, %141 : vector<4x32xf32>
    %143 = vector.extract_strided_slice %142 {offsets = [0, 0], sizes = [2, 32], strides = [1, 1]} : vector<4x32xf32> to vector<2x32xf32>
    %c6 = arith.constant 6 : index
    %c0_30 = arith.constant 0 : index
    %144 = vector.load %arg10[%c6, %c0_30] : memref<16x32xf32, #tpu.memory_space<vmem>>, vector<2x32xf32>
    tpu.vector_store %arg10[%c6, %c0_30], %143 {strides = array<i32>} : memref<16x32xf32, #tpu.memory_space<vmem>>, vector<2x32xf32>,
    %145 = vector.extract_strided_slice %142 {offsets = [2, 0], sizes = [2, 32], strides = [1, 1]} : vector<4x32xf32> to vector<2x32xf32>
    %c8 = arith.constant 8 : index
    %c0_31 = arith.constant 0 : index
    %146 = vector.load %arg11[%c8, %c0_31] : memref<16x32xf32, #tpu.memory_space<vmem>>, vector<2x32xf32>
    tpu.vector_store %arg11[%c8, %c0_31], %145 {strides = array<i32>} : memref<16x32xf32, #tpu.memory_space<vmem>>, vector<2x32xf32>,
    %147 = vector.extract_strided_slice %27 {offsets = [8, 0], sizes = [2, 128], strides = [1, 1]} : vector<16x128xf32> to vector<2x128xf32>
    %148 = vector.extract_strided_slice %28 {offsets = [6, 0], sizes = [2, 128], strides = [1, 1]} : vector<16x128xf32> to vector<2x128xf32>
    %149 = tpu.concatenate %147, %148 in 0 : vector<2x128xf32>, vector<2x128xf32> -> vector<4x128xf32>
    %cst_32 = arith.constant dense<0.000000e+00> : vector<4x256xf32>
    %150 = tpu.matmul %142, %29, %cst_32 {dimension_numbers = #tpu.dot_dimension_numbers<[1], [0], [0], [1], [0, 0, 1, 1], [], []>} : vector<4x32xf32>, vector<32x256xf32>, vector<4x256xf32> -> vector<4x256xf32>
    %151 = vector.extract_strided_slice %150 {offsets = [0, 0], sizes = [4, 128], strides = [1, 1]} : vector<4x256xf32> to vector<4x128xf32>
    %152 = vector.extract_strided_slice %150 {offsets = [0, 128], sizes = [4, 128], strides = [1, 1]} : vector<4x256xf32> to vector<4x128xf32>
    %153 = arith.select %32, %151, %152 : vector<4x128xi1>, vector<4x128xf32>
    %154 = arith.addf %149, %153 : vector<4x128xf32>
    %155 = math.tanh %154 : vector<4x128xf32>
    %156 = arith.negf %154 : vector<4x128xf32>
    %157 = math.exp %156 : vector<4x128xf32>
    %cst_33 = arith.constant 1.000000e+00 : f32
    %158 = vector.broadcast %cst_33 : f32 to vector<4x128xf32>
    %159 = arith.addf %158, %157 : vector<4x128xf32>
    %160 = arith.divf %158, %159 : vector<4x128xf32>
    %161 = arith.select %38, %155, %160 : vector<4x128xi1>, vector<4x128xf32>
    %162 = vector.extract_strided_slice %161 {offsets = [0, 0], sizes = [4, 32], strides = [1, 1]} : vector<4x128xf32> to vector<4x32xf32>
    %163 = vector.extract_strided_slice %161 {offsets = [0, 32], sizes = [4, 32], strides = [1, 1]} : vector<4x128xf32> to vector<4x32xf32>
    %164 = vector.extract_strided_slice %161 {offsets = [0, 64], sizes = [4, 32], strides = [1, 1]} : vector<4x128xf32> to vector<4x32xf32>
    %165 = vector.extract_strided_slice %161 {offsets = [0, 96], sizes = [4, 32], strides = [1, 1]} : vector<4x128xf32> to vector<4x32xf32>
    %166 = arith.mulf %163, %140 : vector<4x32xf32>
    %167 = arith.mulf %162, %164 : vector<4x32xf32>
    %168 = arith.addf %166, %167 : vector<4x32xf32>
    %169 = math.tanh %168 : vector<4x32xf32>
    %170 = arith.mulf %165, %169 : vector<4x32xf32>
    %171 = vector.extract_strided_slice %170 {offsets = [0, 0], sizes = [2, 32], strides = [1, 1]} : vector<4x32xf32> to vector<2x32xf32>
    %c8_34 = arith.constant 8 : index
    %c0_35 = arith.constant 0 : index
    %172 = vector.load %arg10[%c8_34, %c0_35] : memref<16x32xf32, #tpu.memory_space<vmem>>, vector<2x32xf32>
    tpu.vector_store %arg10[%c8_34, %c0_35], %171 {strides = array<i32>} : memref<16x32xf32, #tpu.memory_space<vmem>>, vector<2x32xf32>,
    %173 = vector.extract_strided_slice %170 {offsets = [2, 0], sizes = [2, 32], strides = [1, 1]} : vector<4x32xf32> to vector<2x32xf32>
    %c6_36 = arith.constant 6 : index
    %c0_37 = arith.constant 0 : index
    %174 = vector.load %arg11[%c6_36, %c0_37] : memref<16x32xf32, #tpu.memory_space<vmem>>, vector<2x32xf32>
    tpu.vector_store %arg11[%c6_36, %c0_37], %173 {strides = array<i32>} : memref<16x32xf32, #tpu.memory_space<vmem>>, vector<2x32xf32>,
    %175 = vector.extract_strided_slice %27 {offsets = [10, 0], sizes = [2, 128], strides = [1, 1]} : vector<16x128xf32> to vector<2x128xf32>
    %176 = vector.extract_strided_slice %28 {offsets = [4, 0], sizes = [2, 128], strides = [1, 1]} : vector<16x128xf32> to vector<2x128xf32>
    %177 = tpu.concatenate %175, %176 in 0 : vector<2x128xf32>, vector<2x128xf32> -> vector<4x128xf32>
    %cst_38 = arith.constant dense<0.000000e+00> : vector<4x256xf32>
    %178 = tpu.matmul %170, %29, %cst_38 {dimension_numbers = #tpu.dot_dimension_numbers<[1], [0], [0], [1], [0, 0, 1, 1], [], []>} : vector<4x32xf32>, vector<32x256xf32>, vector<4x256xf32> -> vector<4x256xf32>
    %179 = vector.extract_strided_slice %178 {offsets = [0, 0], sizes = [4, 128], strides = [1, 1]} : vector<4x256xf32> to vector<4x128xf32>
    %180 = vector.extract_strided_slice %178 {offsets = [0, 128], sizes = [4, 128], strides = [1, 1]} : vector<4x256xf32> to vector<4x128xf32>
    %181 = arith.select %32, %179, %180 : vector<4x128xi1>, vector<4x128xf32>
    %182 = arith.addf %177, %181 : vector<4x128xf32>
    %183 = math.tanh %182 : vector<4x128xf32>
    %184 = arith.negf %182 : vector<4x128xf32>
    %185 = math.exp %184 : vector<4x128xf32>
    %cst_39 = arith.constant 1.000000e+00 : f32
    %186 = vector.broadcast %cst_39 : f32 to vector<4x128xf32>
    %187 = arith.addf %186, %185 : vector<4x128xf32>
    %188 = arith.divf %186, %187 : vector<4x128xf32>
    %189 = arith.select %38, %183, %188 : vector<4x128xi1>, vector<4x128xf32>
    %190 = vector.extract_strided_slice %189 {offsets = [0, 0], sizes = [4, 32], strides = [1, 1]} : vector<4x128xf32> to vector<4x32xf32>
    %191 = vector.extract_strided_slice %189 {offsets = [0, 32], sizes = [4, 32], strides = [1, 1]} : vector<4x128xf32> to vector<4x32xf32>
    %192 = vector.extract_strided_slice %189 {offsets = [0, 64], sizes = [4, 32], strides = [1, 1]} : vector<4x128xf32> to vector<4x32xf32>
    %193 = vector.extract_strided_slice %189 {offsets = [0, 96], sizes = [4, 32], strides = [1, 1]} : vector<4x128xf32> to vector<4x32xf32>
    %194 = arith.mulf %191, %168 : vector<4x32xf32>
    %195 = arith.mulf %190, %192 : vector<4x32xf32>
    %196 = arith.addf %194, %195 : vector<4x32xf32>
    %197 = math.tanh %196 : vector<4x32xf32>
    %198 = arith.mulf %193, %197 : vector<4x32xf32>
    %199 = vector.extract_strided_slice %198 {offsets = [0, 0], sizes = [2, 32], strides = [1, 1]} : vector<4x32xf32> to vector<2x32xf32>
    %c10_40 = arith.constant 10 : index
    %c0_41 = arith.constant 0 : index
    %200 = vector.load %arg10[%c10_40, %c0_41] : memref<16x32xf32, #tpu.memory_space<vmem>>, vector<2x32xf32>
    tpu.vector_store %arg10[%c10_40, %c0_41], %199 {strides = array<i32>} : memref<16x32xf32, #tpu.memory_space<vmem>>, vector<2x32xf32>,
    %201 = vector.extract_strided_slice %198 {offsets = [2, 0], sizes = [2, 32], strides = [1, 1]} : vector<4x32xf32> to vector<2x32xf32>
    %c4_42 = arith.constant 4 : index
    %c0_43 = arith.constant 0 : index
    %202 = vector.load %arg11[%c4_42, %c0_43] : memref<16x32xf32, #tpu.memory_space<vmem>>, vector<2x32xf32>
    tpu.vector_store %arg11[%c4_42, %c0_43], %201 {strides = array<i32>} : memref<16x32xf32, #tpu.memory_space<vmem>>, vector<2x32xf32>,
    %203 = vector.extract_strided_slice %27 {offsets = [12, 0], sizes = [2, 128], strides = [1, 1]} : vector<16x128xf32> to vector<2x128xf32>
    %204 = vector.extract_strided_slice %28 {offsets = [2, 0], sizes = [2, 128], strides = [1, 1]} : vector<16x128xf32> to vector<2x128xf32>
    %205 = tpu.concatenate %203, %204 in 0 : vector<2x128xf32>, vector<2x128xf32> -> vector<4x128xf32>
    %cst_44 = arith.constant dense<0.000000e+00> : vector<4x256xf32>
    %206 = tpu.matmul %198, %29, %cst_44 {dimension_numbers = #tpu.dot_dimension_numbers<[1], [0], [0], [1], [0, 0, 1, 1], [], []>} : vector<4x32xf32>, vector<32x256xf32>, vector<4x256xf32> -> vector<4x256xf32>
    %207 = vector.extract_strided_slice %206 {offsets = [0, 0], sizes = [4, 128], strides = [1, 1]} : vector<4x256xf32> to vector<4x128xf32>
    %208 = vector.extract_strided_slice %206 {offsets = [0, 128], sizes = [4, 128], strides = [1, 1]} : vector<4x256xf32> to vector<4x128xf32>
    %209 = arith.select %32, %207, %208 : vector<4x128xi1>, vector<4x128xf32>
    %210 = arith.addf %205, %209 : vector<4x128xf32>
    %211 = math.tanh %210 : vector<4x128xf32>
    %212 = arith.negf %210 : vector<4x128xf32>
    %213 = math.exp %212 : vector<4x128xf32>
    %cst_45 = arith.constant 1.000000e+00 : f32
    %214 = vector.broadcast %cst_45 : f32 to vector<4x128xf32>
    %215 = arith.addf %214, %213 : vector<4x128xf32>
    %216 = arith.divf %214, %215 : vector<4x128xf32>
    %217 = arith.select %38, %211, %216 : vector<4x128xi1>, vector<4x128xf32>
    %218 = vector.extract_strided_slice %217 {offsets = [0, 0], sizes = [4, 32], strides = [1, 1]} : vector<4x128xf32> to vector<4x32xf32>
    %219 = vector.extract_strided_slice %217 {offsets = [0, 32], sizes = [4, 32], strides = [1, 1]} : vector<4x128xf32> to vector<4x32xf32>
    %220 = vector.extract_strided_slice %217 {offsets = [0, 64], sizes = [4, 32], strides = [1, 1]} : vector<4x128xf32> to vector<4x32xf32>
    %221 = vector.extract_strided_slice %217 {offsets = [0, 96], sizes = [4, 32], strides = [1, 1]} : vector<4x128xf32> to vector<4x32xf32>
    %222 = arith.mulf %219, %196 : vector<4x32xf32>
    %223 = arith.mulf %218, %220 : vector<4x32xf32>
    %224 = arith.addf %222, %223 : vector<4x32xf32>
    %225 = math.tanh %224 : vector<4x32xf32>
    %226 = arith.mulf %221, %225 : vector<4x32xf32>
    %227 = vector.extract_strided_slice %226 {offsets = [0, 0], sizes = [2, 32], strides = [1, 1]} : vector<4x32xf32> to vector<2x32xf32>
    %c12_46 = arith.constant 12 : index
    %c0_47 = arith.constant 0 : index
    %228 = vector.load %arg10[%c12_46, %c0_47] : memref<16x32xf32, #tpu.memory_space<vmem>>, vector<2x32xf32>
    tpu.vector_store %arg10[%c12_46, %c0_47], %227 {strides = array<i32>} : memref<16x32xf32, #tpu.memory_space<vmem>>, vector<2x32xf32>,
    %229 = vector.extract_strided_slice %226 {offsets = [2, 0], sizes = [2, 32], strides = [1, 1]} : vector<4x32xf32> to vector<2x32xf32>
    %c2_48 = arith.constant 2 : index
    %c0_49 = arith.constant 0 : index
    %230 = vector.load %arg11[%c2_48, %c0_49] : memref<16x32xf32, #tpu.memory_space<vmem>>, vector<2x32xf32>
    tpu.vector_store %arg11[%c2_48, %c0_49], %229 {strides = array<i32>} : memref<16x32xf32, #tpu.memory_space<vmem>>, vector<2x32xf32>,
    %231 = vector.extract_strided_slice %27 {offsets = [14, 0], sizes = [2, 128], strides = [1, 1]} : vector<16x128xf32> to vector<2x128xf32>
    %232 = vector.extract_strided_slice %28 {offsets = [0, 0], sizes = [2, 128], strides = [1, 1]} : vector<16x128xf32> to vector<2x128xf32>
    %233 = tpu.concatenate %231, %232 in 0 : vector<2x128xf32>, vector<2x128xf32> -> vector<4x128xf32>
    %cst_50 = arith.constant dense<0.000000e+00> : vector<4x256xf32>
    %234 = tpu.matmul %226, %29, %cst_50 {dimension_numbers = #tpu.dot_dimension_numbers<[1], [0], [0], [1], [0, 0, 1, 1], [], []>} : vector<4x32xf32>, vector<32x256xf32>, vector<4x256xf32> -> vector<4x256xf32>
    %235 = vector.extract_strided_slice %234 {offsets = [0, 0], sizes = [4, 128], strides = [1, 1]} : vector<4x256xf32> to vector<4x128xf32>
    %236 = vector.extract_strided_slice %234 {offsets = [0, 128], sizes = [4, 128], strides = [1, 1]} : vector<4x256xf32> to vector<4x128xf32>
    %237 = arith.select %32, %235, %236 : vector<4x128xi1>, vector<4x128xf32>
    %238 = arith.addf %233, %237 : vector<4x128xf32>
    %239 = math.tanh %238 : vector<4x128xf32>
    %240 = arith.negf %238 : vector<4x128xf32>
    %241 = math.exp %240 : vector<4x128xf32>
    %cst_51 = arith.constant 1.000000e+00 : f32
    %242 = vector.broadcast %cst_51 : f32 to vector<4x128xf32>
    %243 = arith.addf %242, %241 : vector<4x128xf32>
    %244 = arith.divf %242, %243 : vector<4x128xf32>
    %245 = arith.select %38, %239, %244 : vector<4x128xi1>, vector<4x128xf32>
    %246 = vector.extract_strided_slice %245 {offsets = [0, 0], sizes = [4, 32], strides = [1, 1]} : vector<4x128xf32> to vector<4x32xf32>
    %247 = vector.extract_strided_slice %245 {offsets = [0, 32], sizes = [4, 32], strides = [1, 1]} : vector<4x128xf32> to vector<4x32xf32>
    %248 = vector.extract_strided_slice %245 {offsets = [0, 64], sizes = [4, 32], strides = [1, 1]} : vector<4x128xf32> to vector<4x32xf32>
    %249 = vector.extract_strided_slice %245 {offsets = [0, 96], sizes = [4, 32], strides = [1, 1]} : vector<4x128xf32> to vector<4x32xf32>
    %250 = arith.mulf %247, %224 : vector<4x32xf32>
    %251 = arith.mulf %246, %248 : vector<4x32xf32>
    %252 = arith.addf %250, %251 : vector<4x32xf32>
    %253 = math.tanh %252 : vector<4x32xf32>
    %254 = arith.mulf %249, %253 : vector<4x32xf32>
    %255 = vector.extract_strided_slice %254 {offsets = [0, 0], sizes = [2, 32], strides = [1, 1]} : vector<4x32xf32> to vector<2x32xf32>
    %c14_52 = arith.constant 14 : index
    %c0_53 = arith.constant 0 : index
    %256 = vector.load %arg10[%c14_52, %c0_53] : memref<16x32xf32, #tpu.memory_space<vmem>>, vector<2x32xf32>
    tpu.vector_store %arg10[%c14_52, %c0_53], %255 {strides = array<i32>} : memref<16x32xf32, #tpu.memory_space<vmem>>, vector<2x32xf32>,
    %257 = vector.extract_strided_slice %254 {offsets = [2, 0], sizes = [2, 32], strides = [1, 1]} : vector<4x32xf32> to vector<2x32xf32>
    %c0_54 = arith.constant 0 : index
    %c0_55 = arith.constant 0 : index
    %258 = vector.load %arg11[%c0_54, %c0_55] : memref<16x32xf32, #tpu.memory_space<vmem>>, vector<2x32xf32>
    tpu.vector_store %arg11[%c0_54, %c0_55], %257 {strides = array<i32>} : memref<16x32xf32, #tpu.memory_space<vmem>>, vector<2x32xf32>,
    %c0_56 = arith.constant 0 : index
    %c0_57 = arith.constant 0 : index
    %259 = vector.load %arg10[%c0_56, %c0_57] : memref<16x32xf32, #tpu.memory_space<vmem>>, vector<16x32xf32>
    %c0_58 = arith.constant 0 : index
    %c0_59 = arith.constant 0 : index
    %260 = vector.load %arg7[%c0_58, %c0_59] : memref<64x128xf32, #tpu.memory_space<vmem>>, vector<32x128xf32>
    %cst_60 = arith.constant dense<0.000000e+00> : vector<16x128xf32>
    %261 = tpu.matmul %259, %260, %cst_60 {dimension_numbers = #tpu.dot_dimension_numbers<[1], [0], [0], [1], [0, 0, 1, 1], [], []>} : vector<16x32xf32>, vector<32x128xf32>, vector<16x128xf32> -> vector<16x128xf32>
    %c0_61 = arith.constant 0 : index
    %c0_62 = arith.constant 0 : index
    %262 = vector.load %arg11[%c0_61, %c0_62] : memref<16x32xf32, #tpu.memory_space<vmem>>, vector<16x32xf32>
    %c32 = arith.constant 32 : index
    %c0_63 = arith.constant 0 : index
    %263 = vector.load %arg7[%c32, %c0_63] : memref<64x128xf32, #tpu.memory_space<vmem>>, vector<32x128xf32>
    %cst_64 = arith.constant dense<0.000000e+00> : vector<16x128xf32>
    %264 = tpu.matmul %262, %263, %cst_64 {dimension_numbers = #tpu.dot_dimension_numbers<[1], [0], [0], [1], [0, 0, 1, 1], [], []>} : vector<16x32xf32>, vector<32x128xf32>, vector<16x128xf32> -> vector<16x128xf32>
    %265 = arith.addf %261, %264 : vector<16x128xf32>
    %c0_65 = arith.constant 0 : index
    %c0_66 = arith.constant 0 : index
    %266 = vector.load %arg8[%c0_65, %c0_66] : memref<1x128xf32, #tpu.memory_space<vmem>>, vector<1x128xf32>
    %267 = vector.broadcast %266 : vector<1x128xf32> to vector<16x128xf32>
    %268 = arith.addf %265, %267 : vector<16x128xf32>
    %cst_67 = arith.constant dense<0xFF800000> : vector<16xf32>
    %269 = vector.multi_reduction <maximumf>, %268, %cst_67 [1] : vector<16x128xf32> to vector<16xf32>
    %270 = vector.shape_cast %269 : vector<16xf32> to vector<16x1xf32>
    %271 = vector.broadcast %270 : vector<16x1xf32> to vector<16x128xf32>
    %272 = arith.subf %268, %271 : vector<16x128xf32>
    %273 = math.exp %272 : vector<16x128xf32>
    %cst_68 = arith.constant dense<0.000000e+00> : vector<16xf32>
    %274 = vector.multi_reduction <add>, %273, %cst_68 [1] : vector<16x128xf32> to vector<16xf32>
    %275 = vector.shape_cast %274 : vector<16xf32> to vector<16x1xf32>
    %276 = math.log %275 : vector<16x1xf32>
    %277 = vector.broadcast %276 : vector<16x1xf32> to vector<16x128xf32>
    %278 = arith.subf %272, %277 : vector<16x128xf32>
    %279 = vector.shape_cast %278 : vector<16x128xf32> to vector<8x2x128xf32>
    %c0_69 = arith.constant 0 : index
    %c0_70 = arith.constant 0 : index
    %c0_71 = arith.constant 0 : index
    %280 = vector.load %arg9[%c0_69, %c0_70, %c0_71] : memref<8x2x128xf32, #tpu.memory_space<vmem>>, vector<8x2x128xf32>
    tpu.vector_store %arg9[%c0_69, %c0_70, %c0_71], %279 {strides = array<i32>} : memref<8x2x128xf32, #tpu.memory_space<vmem>>, vector<8x2x128xf32>,
    return
  }
  func.func @transform_0(%arg0: i32) -> (i32, i32, i32, i32) {
    %c0_i32 = arith.constant 0 : i32
    %c0_i32_0 = arith.constant 0 : i32
    %c0_i32_1 = arith.constant 0 : i32
    %c0_i32_2 = arith.constant 0 : i32
    return %c0_i32, %c0_i32_0, %arg0, %c0_i32_1 : i32, i32, i32, i32
  }
  func.func @transform_1(%arg0: i32) -> (i32, i32) {
    %c0_i32 = arith.constant 0 : i32
    %c0_i32_0 = arith.constant 0 : i32
    %c0_i32_1 = arith.constant 0 : i32
    return %c0_i32, %c0_i32_0 : i32, i32
  }
  func.func @transform_2(%arg0: i32) -> (i32, i32) {
    %c0_i32 = arith.constant 0 : i32
    %c0_i32_0 = arith.constant 0 : i32
    %c0_i32_1 = arith.constant 0 : i32
    return %c0_i32, %c0_i32_0 : i32, i32
  }
  func.func @transform_3(%arg0: i32) -> (i32, i32) {
    %c0_i32 = arith.constant 0 : i32
    %c0_i32_0 = arith.constant 0 : i32
    %c0_i32_1 = arith.constant 0 : i32
    return %c0_i32, %c0_i32_0 : i32, i32
  }
  func.func @transform_4(%arg0: i32) -> (i32, i32) {
    %c0_i32 = arith.constant 0 : i32
    %c0_i32_0 = arith.constant 0 : i32
    %c0_i32_1 = arith.constant 0 : i32
    return %c0_i32, %c0_i32_0 : i32, i32
  }
  func.func @transform_5(%arg0: i32) -> (i32, i32) {
    %c0_i32 = arith.constant 0 : i32
    %c0_i32_0 = arith.constant 0 : i32
    %c0_i32_1 = arith.constant 0 : i32
    return %c0_i32, %c0_i32_0 : i32, i32
  }
  func.func @transform_6(%arg0: i32) -> (i32, i32) {
    %c0_i32 = arith.constant 0 : i32
    %c0_i32_0 = arith.constant 0 : i32
    %c0_i32_1 = arith.constant 0 : i32
    return %c0_i32, %c0_i32_0 : i32, i32
  }
  func.func @transform_7(%arg0: i32) -> (i32, i32) {
    %c0_i32 = arith.constant 0 : i32
    %c0_i32_0 = arith.constant 0 : i32
    %c0_i32_1 = arith.constant 0 : i32
    return %c0_i32, %c0_i32_0 : i32, i32
  }
  func.func @transform_8(%arg0: i32) -> (i32, i32, i32) {
    %c0_i32 = arith.constant 0 : i32
    %c0_i32_0 = arith.constant 0 : i32
    %c0_i32_1 = arith.constant 0 : i32
    return %c0_i32, %arg0, %c0_i32_0 : i32, i32, i32
  }
}

</mosaic_0001>

<llo_original>
// kernel: tile.8
$region0: #{tile.8}
  #allocation0 [shape = 's32[1]{0}', space=sflag, size = 0x4, scoped, tag = 'scoped memory for tile.8']
  %s0 = inlined_call_operand.vmem [shape: f32[64], index: 0, kind: input, shape index: {}]
  %s1 = inlined_call_operand.vmem [shape: f32[8,64], index: 1, kind: output, shape index: {}]
  // Predicated region
  $region2: #{tile.8} parent=0 // pred_check
    _
  $region3: #{tile.8} parent=0 // pred_check_branch
    %3 = sbr.rel (0) target = $region5
  $region4: #{tile.8} parent=0 // pred_region
    _
  $region5: #{tile.8} parent=0 // pred_fallthru
    _
  %v4 = vld [vmem:[%s0] ss:$0 sm:$0xff]
  %5 = vst [vmem:[%s1] sm:$0xff] %v4

// kernel: tile.9
$region0: #{tile.9}
  %s0 = inlined_call_operand.vmem [shape: f32[8,64], index: 0, kind: input, shape index: {}]
  %s1 = inlined_call_operand.vmem [shape: f32[1,512], index: 1, kind: output, shape index: {}]
  $region1: #{tile.9} parent=0
    #allocation0 [shape = 'u8[16384]{0}', space=vmem, size = 0x4000, scoped, tag = 'scoped mem for output reshape']
    %v2 = vld [vmem:[%s0] ss:$2 sm:$0xf]
    %vm3 = vcmask 523264
    %4 = vst.msk [vmem:[#allocation0] ss:$8 sm:$0xf] %vm3, %v2
    %s5 = scalar_lea.vmem %s0, 1
    %v6 = vld [vmem:[%s5] ss:$2 sm:$0xf]
    %7 = vrot.lane.b32.xlu0 %v6, 64
    %v8 = vpop.permute.xlu0 %7
    %vm9 = vcmask 1048064
    %10 = vst.msk [vmem:[#allocation0] ss:$8 sm:$0xf] %vm9, %v8
    %s12 = ssub.s32 2, 1
    %v13 = vld [vmem:[#allocation0] sm:%s12]
    %s15 = ssub.s32 2, 1
    %16 = vst [vmem:[%s1] sm:%s15] %v13
    %s17 = scalar_lea.vmem [#allocation0], 8
    %v18 = vld [vmem:[%s17] sm:%s12]
    %s20 = ssub.s32 2, 1
    %s21 = scalar_lea.vmem %s1, 1
    %22 = vst [vmem:[%s21] sm:%s20] %v18
    %s23 = scalar_lea.vmem [#allocation0], 16
    %v24 = vld [vmem:[%s23] sm:%s12]
    %s26 = ssub.s32 2, 1
    %s27 = scalar_lea.vmem %s1, 2
    %28 = vst [vmem:[%s27] sm:%s26] %v24
    %s29 = scalar_lea.vmem [#allocation0], 24
    %v30 = vld [vmem:[%s29] sm:%s12]
    %s32 = ssub.s32 2, 1
    %s33 = scalar_lea.vmem %s1, 3
    %34 = vst [vmem:[%s33] sm:%s32] %v30

// kernel: crnn_forward.1
$region0: #{crnn_forward.1}
  #allocation0 [shape = 'u32[]', space=smem, size = 0x4, offset = 0x4, fixed_abs, tag = 'smem constant byte address 0x4 - core index']
  #allocation1 [shape = 'u32[72,128]{1,0:T(1,128)}', space=vmem, size = 0x9000, scoped, tag = 'internal scratch']
  #allocation2 [shape = 'f32[16,32]{1,0:T(8,128)}', space=vmem, size = 0x2000, scoped, tag = 'scratch operand']
  #allocation3 [shape = 'f32[16,32]{1,0:T(8,128)}', space=vmem, size = 0x2000, scoped, tag = 'scratch operand']
  %s0 = inlined_call_operand.vmem [shape: bf16[4,8,2,72], index: 0, kind: input, shape index: {}]
  %s1 = inlined_call_operand.vmem [shape: bf16[72,512], index: 1, kind: input, shape index: {}]
  %s2 = inlined_call_operand.vmem [shape: f32[1,512], index: 2, kind: input, shape index: {}]
  %s3 = inlined_call_operand.vmem [shape: bf16[512,256], index: 3, kind: input, shape index: {}]
  %s4 = inlined_call_operand.vmem [shape: f32[1,256], index: 4, kind: input, shape index: {}]
  %s5 = inlined_call_operand.vmem [shape: f32[32,256], index: 5, kind: input, shape index: {}]
  %s6 = inlined_call_operand.vmem [shape: f32[64,128], index: 6, kind: input, shape index: {}]
  %s7 = inlined_call_operand.vmem [shape: f32[1,128], index: 7, kind: input, shape index: {}]
  %s8 = inlined_call_operand.hbm [shape: f32[8,2,128], index: 8, kind: output, shape index: {}]
  %s9 = sld [smem:[#allocation0]]
  $region42: #{crnn_forward.1} parent=0
    _
  %s11 = ssub.s32 1, %s9
  %s12 = scalar_select 0, %s11, %s9
  $region1: #{crnn_forward.1} parent=0
    #allocation4 [shape = 'u8[8192]{0}', space=vmem, size = 0x2000, scoped, tag = 'output window, operand 0, single buffered']
    #allocation5 [shape = 's32[1]{0}', space=sflag, size = 0x4, scoped, tag = 'scoped memory for crnn_forward.1']
    %13 = vsyncpa [#allocation5], 0
    // Predicated region
    $region2: #{crnn_forward.1} parent=1 // pred_check
      _
    $region3: #{crnn_forward.1} parent=1 // pred_check_branch
      %15 = sbr.rel (0) target = $region5
    $region4: #{crnn_forward.1} parent=1 // pred_region
      _
    $region5: #{crnn_forward.1} parent=1 // pred_fallthru
      _
    // Predicated region
    $region6: #{crnn_forward.1} parent=1 // pred_check
      _
    $region7: #{crnn_forward.1} parent=1 // pred_check_branch
      %17 = sbr.rel (0) target = $region9
    $region8: #{crnn_forward.1} parent=1 // pred_region
      _
    $region9: #{crnn_forward.1} parent=1 // pred_fallthru
      _
    // Predicated region
    $region10: #{crnn_forward.1} parent=1 // pred_check
      _
    $region11: #{crnn_forward.1} parent=1 // pred_check_branch
      %19 = sbr.rel (0) target = $region13
    $region12: #{crnn_forward.1} parent=1 // pred_region
      _
    $region13: #{crnn_forward.1} parent=1 // pred_fallthru
      _
    // Predicated region
    $region14: #{crnn_forward.1} parent=1 // pred_check
      _
    $region15: #{crnn_forward.1} parent=1 // pred_check_branch
      %21 = sbr.rel (0) target = $region17
    $region16: #{crnn_forward.1} parent=1 // pred_region
      _
    $region17: #{crnn_forward.1} parent=1 // pred_fallthru
      _
    // Predicated region
    $region18: #{crnn_forward.1} parent=1 // pred_check
      _
    $region19: #{crnn_forward.1} parent=1 // pred_check_branch
      %23 = sbr.rel (0) target = $region21
    $region20: #{crnn_forward.1} parent=1 // pred_region
      _
    $region21: #{crnn_forward.1} parent=1 // pred_fallthru
      _
    // Predicated region
    $region22: #{crnn_forward.1} parent=1 // pred_check
      _
    $region23: #{crnn_forward.1} parent=1 // pred_check_branch
      %25 = sbr.rel (0) target = $region25
    $region24: #{crnn_forward.1} parent=1 // pred_region
      _
    $region25: #{crnn_forward.1} parent=1 // pred_fallthru
      _
    // Predicated region
    $region26: #{crnn_forward.1} parent=1 // pred_check
      _
    $region27: #{crnn_forward.1} parent=1 // pred_check_branch
      %27 = sbr.rel (0) target = $region29
    $region28: #{crnn_forward.1} parent=1 // pred_region
      _
    $region29: #{crnn_forward.1} parent=1 // pred_fallthru
      _
    // Predicated region
    $region30: #{crnn_forward.1} parent=1 // pred_check
      _
    $region31: #{crnn_forward.1} parent=1 // pred_check_branch
      %29 = sbr.rel (0) target = $region33
    $region32: #{crnn_forward.1} parent=1 // pred_region
      _
    $region33: #{crnn_forward.1} parent=1 // pred_fallthru
      _
    %v31 = vld [vmem:[%s0] sm:$0x1]
    %v32 = vld [vmem:[%s0 + $0x1] sm:$0x1]
    %v33 = vld [vmem:[%s0 + $0x2] sm:$0x1]
    %v34 = vld [vmem:[%s0 + $0x3] sm:$0x1]
    %v35 = vld [vmem:[%s0 + $0x4] sm:$0x1]
    %v36 = vld [vmem:[%s0 + $0x5] sm:$0x1]
    %v37 = vld [vmem:[%s0 + $0x6] sm:$0x1]
    %v38 = vld [vmem:[%s0 + $0x7] sm:$0x1]
    %v39 = vld [vmem:[%s0 + $0x8] sm:$0x1]
    %v40 = vld [vmem:[%s0 + $0x9] sm:$0x1]
    %v41 = vld [vmem:[%s0 + $0xa] sm:$0x1]
    %v42 = vld [vmem:[%s0 + $0xb] sm:$0x1]
    %v43 = vld [vmem:[%s0 + $0xc] sm:$0x1]
    %v44 = vld [vmem:[%s0 + $0xd] sm:$0x1]
    %v45 = vld [vmem:[%s0 + $0xe] sm:$0x1]
    %v46 = vld [vmem:[%s0 + $0xf] sm:$0x1]
    %v47 = vld [vmem:[%s0 + $0x10] sm:$0x1]
    %v48 = vld [vmem:[%s0 + $0x11] sm:$0x1]
    %v49 = vld [vmem:[%s0 + $0x12] sm:$0x1]
    %v50 = vld [vmem:[%s0 + $0x13] sm:$0x1]
    %v51 = vld [vmem:[%s0 + $0x14] sm:$0x1]
    %v52 = vld [vmem:[%s0 + $0x15] sm:$0x1]
    %v53 = vld [vmem:[%s0 + $0x16] sm:$0x1]
    %v54 = vld [vmem:[%s0 + $0x17] sm:$0x1]
    %v55 = vld [vmem:[%s0 + $0x18] sm:$0x1]
    %v56 = vld [vmem:[%s0 + $0x19] sm:$0x1]
    %v57 = vld [vmem:[%s0 + $0x1a] sm:$0x1]
    %v58 = vld [vmem:[%s0 + $0x1b] sm:$0x1]
    %v59 = vld [vmem:[%s0 + $0x1c] sm:$0x1]
    %v60 = vld [vmem:[%s0 + $0x1d] sm:$0x1]
    %v61 = vld [vmem:[%s0 + $0x1e] sm:$0x1]
    %v62 = vld [vmem:[%s0 + $0x1f] sm:$0x1]
    %v63 = vld [vmem:[%s1] sm:$0xff]
    %v64 = vld [vmem:[%s1 + $0x8] sm:$0xff]
    %v65 = vld [vmem:[%s1 + $0x10] sm:$0xff]
    %v66 = vld [vmem:[%s1 + $0x18] sm:$0xff]
    %v67 = vld [vmem:[%s1 + $0x20] sm:$0xff]
    %v68 = vld [vmem:[%s1 + $0x28] sm:$0xff]
    %v69 = vld [vmem:[%s1 + $0x30] sm:$0xff]
    %v70 = vld [vmem:[%s1 + $0x38] sm:$0xff]
    %v71 = vld [vmem:[%s1 + $0x40] sm:$0xff]
    %v72 = vld [vmem:[%s1 + $0x48] sm:$0xff]
    %v73 = vld [vmem:[%s1 + $0x50] sm:$0xff]
    %v74 = vld [vmem:[%s1 + $0x58] sm:$0xff]
    %v75 = vld [vmem:[%s1 + $0x60] sm:$0xff]
    %v76 = vld [vmem:[%s1 + $0x68] sm:$0xff]
    %v77 = vld [vmem:[%s1 + $0x70] sm:$0xff]
    %v78 = vld [vmem:[%s1 + $0x78] sm:$0xff]
    %v79 = vld [vmem:[%s1 + $0x80] sm:$0xff]
    %v80 = vld [vmem:[%s1 + $0x88] sm:$0xff]
    %82 = vst [vmem:[#allocation1] ss:$9 sm:$0xff] %v31
    %s84 = scalar_lea.vmem [#allocation1], 1
    %85 = vst [vmem:[%s84] ss:$9 sm:$0xff] %v32
    %s87 = scalar_lea.vmem [#allocation1], 2
    %88 = vst [vmem:[%s87] ss:$9 sm:$0xff] %v33
    %s90 = scalar_lea.vmem [#allocation1], 3
    %91 = vst [vmem:[%s90] ss:$9 sm:$0xff] %v34
    %s93 = scalar_lea.vmem [#allocation1], 4
    %94 = vst [vmem:[%s93] ss:$9 sm:$0xff] %v35
    %s96 = scalar_lea.vmem [#allocation1], 5
    %97 = vst [vmem:[%s96] ss:$9 sm:$0xff] %v36
    %s99 = scalar_lea.vmem [#allocation1], 6
    %100 = vst [vmem:[%s99] ss:$9 sm:$0xff] %v37
    %s102 = scalar_lea.vmem [#allocation1], 7
    %103 = vst [vmem:[%s102] ss:$9 sm:$0xff] %v38
    %v104 = vld [vmem:[#allocation1] sm:$0xff]
    %106 = vst [vmem:[#allocation1] ss:$9 sm:$0xff] %v39
    %108 = vst [vmem:[%s84] ss:$9 sm:$0xff] %v40
    %110 = vst [vmem:[%s87] ss:$9 sm:$0xff] %v41
    %112 = vst [vmem:[%s90] ss:$9 sm:$0xff] %v42
    %114 = vst [vmem:[%s93] ss:$9 sm:$0xff] %v43
    %116 = vst [vmem:[%s96] ss:$9 sm:$0xff] %v44
    %118 = vst [vmem:[%s99] ss:$9 sm:$0xff] %v45
    %120 = vst [vmem:[%s102] ss:$9 sm:$0xff] %v46
    %v121 = vld [vmem:[#allocation1] sm:$0xff]
    %123 = vst [vmem:[#allocation1] ss:$9 sm:$0xff] %v47
    %125 = vst [vmem:[%s84] ss:$9 sm:$0xff] %v48
    %127 = vst [vmem:[%s87] ss:$9 sm:$0xff] %v49
    %129 = vst [vmem:[%s90] ss:$9 sm:$0xff] %v50
    %131 = vst [vmem:[%s93] ss:$9 sm:$0xff] %v51
    %133 = vst [vmem:[%s96] ss:$9 sm:$0xff] %v52
    %135 = vst [vmem:[%s99] ss:$9 sm:$0xff] %v53
    %137 = vst [vmem:[%s102] ss:$9 sm:$0xff] %v54
    %v138 = vld [vmem:[#allocation1] sm:$0xff]
    %140 = vst [vmem:[#allocation1] ss:$9 sm:$0xff] %v55
    %142 = vst [vmem:[%s84] ss:$9 sm:$0xff] %v56
    %144 = vst [vmem:[%s87] ss:$9 sm:$0xff] %v57
    %146 = vst [vmem:[%s90] ss:$9 sm:$0xff] %v58
    %148 = vst [vmem:[%s93] ss:$9 sm:$0xff] %v59
    %150 = vst [vmem:[%s96] ss:$9 sm:$0xff] %v60
    %152 = vst [vmem:[%s99] ss:$9 sm:$0xff] %v61
    %154 = vst [vmem:[%s102] ss:$9 sm:$0xff] %v62
    %v155 = vld [vmem:[#allocation1] sm:$0xff]
    %v174 = vunpack.c.l.b16 %v63
    %v175 = vunpack.c.h.b16 %v63
    %v176 = vunpack.c.l.b16 %v64
    %v177 = vunpack.c.h.b16 %v64
    %v178 = vunpack.c.l.b16 %v65
    %v179 = vunpack.c.h.b16 %v65
    %v180 = vunpack.c.l.b16 %v66
    %v181 = vunpack.c.h.b16 %v66
    %v182 = vunpack.c.l.b16 %v67
    %v183 = vunpack.c.h.b16 %v67
    %v184 = vunpack.c.l.b16 %v68
    %v185 = vunpack.c.h.b16 %v68
    %v186 = vunpack.c.l.b16 %v69
    %v187 = vunpack.c.h.b16 %v69
    %v188 = vunpack.c.l.b16 %v70
    %v189 = vunpack.c.h.b16 %v70
    %v190 = vunpack.c.l.b16 %v71
    %v191 = vunpack.c.h.b16 %v71
    %v192 = vunpack.c.l.b16 %v72
    %v193 = vunpack.c.h.b16 %v72
    %v194 = vunpack.c.l.b16 %v73
    %v195 = vunpack.c.h.b16 %v73
    %v196 = vunpack.c.l.b16 %v74
    %v197 = vunpack.c.h.b16 %v74
    %v198 = vunpack.c.l.b16 %v75
    %v199 = vunpack.c.h.b16 %v75
    %v200 = vunpack.c.l.b16 %v76
    %v201 = vunpack.c.h.b16 %v76
    %v202 = vunpack.c.l.b16 %v77
    %v203 = vunpack.c.h.b16 %v77
    %v204 = vunpack.c.l.b16 %v78
    %v205 = vunpack.c.h.b16 %v78
    %v206 = vunpack.c.l.b16 %v79
    %v207 = vunpack.c.h.b16 %v79
    %v208 = vunpack.c.l.b16 %v80
    %v209 = vunpack.c.h.b16 %v80
    %v210 = vpack.c.b16 %v178, %v174
    %v211 = vpack.c.b16 %v179, %v175
    %v212 = vpack.c.b16 %v180, %v176
    %v213 = vpack.c.b16 %v181, %v177
    %v214 = vpack.c.b16 %v186, %v182
    %v215 = vpack.c.b16 %v187, %v183
    %v216 = vpack.c.b16 %v188, %v184
    %v217 = vpack.c.b16 %v189, %v185
    %v218 = vpack.c.b16 %v194, %v190
    %v219 = vpack.c.b16 %v195, %v191
    %v220 = vpack.c.b16 %v196, %v192
    %v221 = vpack.c.b16 %v197, %v193
    %v222 = vpack.c.b16 %v202, %v198
    %v223 = vpack.c.b16 %v203, %v199
    %v224 = vpack.c.b16 %v204, %v200
    %v225 = vpack.c.b16 %v205, %v201
    %v226 = vpack.c.b16 %v206, %v206
    %v227 = vpack.c.b16 %v207, %v207
    %v228 = vpack.c.b16 %v208, %v208
    %v229 = vpack.c.b16 %v209, %v209
    %vm246 = vcmask 588800
    %v247 = vsel %vm246, %v104, 0
    %v249 = vsel %vm246, %v121, 0
    %v251 = vsel %vm246, %v138, 0
    %v253 = vsel %vm246, %v155, 0
    %vm255 = vcmask 1043456
    %v257 = vsel %vm255, %v226, 0
    %v260 = vsel %vm255, %v227, 0
    %v263 = vsel %vm255, %v228, 0
    %v266 = vsel %vm255, %v229, 0
    %268 = vmatpush.bf16.msra.mxu0 0
    %269 = vmatpush.bf16.msra.mxu0 0
    %270 = vmatpush.bf16.msra.mxu0 0
    %271 = vmatpush.bf16.msra.mxu0 %v257
    %272 = vmatpush.bf16.msra.mxu0 %v222
    %273 = vmatpush.bf16.msra.mxu0 %v218
    %274 = vmatpush.bf16.msra.mxu0 %v214
    %275 = vmatpush.bf16.msra.mxu0 %v210
    %276 = vmatmul.bf16.gmra.mxu0 %v247
    %v277 = vpop.f32.mrf.mxu0
    %v278 = vadd.f32 0.0, %v277
    %v279 = vpop.f32.mrf.mxu0
    %v280 = vadd.f32 0.0, %v279
    %281 = vmatmul.bf16.gmra.mxu0 %v249
    %v282 = vpop.f32.mrf.mxu0
    %v283 = vadd.f32 0.0, %v282
    %v284 = vpop.f32.mrf.mxu0
    %v285 = vadd.f32 0.0, %v284
    %286 = vmatmul.bf16.gmra.mxu0 %v251
    %v287 = vpop.f32.mrf.mxu0
    %v288 = vadd.f32 0.0, %v287
    %v289 = vpop.f32.mrf.mxu0
    %v290 = vadd.f32 0.0, %v289
    %291 = vmatmul.bf16.gmra.mxu0 %v253
    %v292 = vpop.f32.mrf.mxu0
    %v293 = vadd.f32 0.0, %v292
    %v294 = vpop.f32.mrf.mxu0
    %v295 = vadd.f32 0.0, %v294
    %296 = vdwg.mxu0
    %297 = vmatpush.bf16.msra.mxu0 0
    %298 = vmatpush.bf16.msra.mxu0 0
    %299 = vmatpush.bf16.msra.mxu0 0
    %300 = vmatpush.bf16.msra.mxu0 %v260
    %301 = vmatpush.bf16.msra.mxu0 %v223
    %302 = vmatpush.bf16.msra.mxu0 %v219
    %303 = vmatpush.bf16.msra.mxu0 %v215
    %304 = vmatpush.bf16.msra.mxu0 %v211
    %305 = vmatmul.bf16.gmra.mxu0 %v247
    %v306 = vpop.f32.mrf.mxu0
    %v307 = vadd.f32 0.0, %v306
    %v308 = vpop.f32.mrf.mxu0
    %v309 = vadd.f32 0.0, %v308
    %310 = vmatmul.bf16.gmra.mxu0 %v249
    %v311 = vpop.f32.mrf.mxu0
    %v312 = vadd.f32 0.0, %v311
    %v313 = vpop.f32.mrf.mxu0
    %v314 = vadd.f32 0.0, %v313
    %315 = vmatmul.bf16.gmra.mxu0 %v251
    %v316 = vpop.f32.mrf.mxu0
    %v317 = vadd.f32 0.0, %v316
    %v318 = vpop.f32.mrf.mxu0
    %v319 = vadd.f32 0.0, %v318
    %320 = vmatmul.bf16.gmra.mxu0 %v253
    %v321 = vpop.f32.mrf.mxu0
    %v322 = vadd.f32 0.0, %v321
    %v323 = vpop.f32.mrf.mxu0
    %v324 = vadd.f32 0.0, %v323
    %325 = vdwg.mxu0
    %326 = vmatpush.bf16.msra.mxu0 0
    %327 = vmatpush.bf16.msra.mxu0 0
    %328 = vmatpush.bf16.msra.mxu0 0
    %329 = vmatpush.bf16.msra.mxu0 %v263
    %330 = vmatpush.bf16.msra.mxu0 %v224
    %331 = vmatpush.bf16.msra.mxu0 %v220
    %332 = vmatpush.bf16.msra.mxu0 %v216
    %333 = vmatpush.bf16.msra.mxu0 %v212
    %334 = vmatmul.bf16.gmra.mxu0 %v247
    %v335 = vpop.f32.mrf.mxu0
    %v336 = vadd.f32 0.0, %v335
    %v337 = vpop.f32.mrf.mxu0
    %v338 = vadd.f32 0.0, %v337
    %339 = vmatmul.bf16.gmra.mxu0 %v249
    %v340 = vpop.f32.mrf.mxu0
    %v341 = vadd.f32 0.0, %v340
    %v342 = vpop.f32.mrf.mxu0
    %v343 = vadd.f32 0.0, %v342
    %344 = vmatmul.bf16.gmra.mxu0 %v251
    %v345 = vpop.f32.mrf.mxu0
    %v346 = vadd.f32 0.0, %v345
    %v347 = vpop.f32.mrf.mxu0
    %v348 = vadd.f32 0.0, %v347
    %349 = vmatmul.bf16.gmra.mxu0 %v253
    %v350 = vpop.f32.mrf.mxu0
    %v351 = vadd.f32 0.0, %v350
    %v352 = vpop.f32.mrf.mxu0
    %v353 = vadd.f32 0.0, %v352
    %354 = vdwg.mxu0
    %355 = vmatpush.bf16.msra.mxu0 0
    %356 = vmatpush.bf16.msra.mxu0 0
    %357 = vmatpush.bf16.msra.mxu0 0
    %358 = vmatpush.bf16.msra.mxu0 %v266
    %359 = vmatpush.bf16.msra.mxu0 %v225
    %360 = vmatpush.bf16.msra.mxu0 %v221
    %361 = vmatpush.bf16.msra.mxu0 %v217
    %362 = vmatpush.bf16.msra.mxu0 %v213
    %363 = vmatmul.bf16.gmra.mxu0 %v247
    %v364 = vpop.f32.mrf.mxu0
    %v365 = vadd.f32 0.0, %v364
    %v366 = vpop.f32.mrf.mxu0
    %v367 = vadd.f32 0.0, %v366
    %368 = vmatmul.bf16.gmra.mxu0 %v249
    %v369 = vpop.f32.mrf.mxu0
    %v370 = vadd.f32 0.0, %v369
    %v371 = vpop.f32.mrf.mxu0
    %v372 = vadd.f32 0.0, %v371
    %373 = vmatmul.bf16.gmra.mxu0 %v251
    %v374 = vpop.f32.mrf.mxu0
    %v375 = vadd.f32 0.0, %v374
    %v376 = vpop.f32.mrf.mxu0
    %v377 = vadd.f32 0.0, %v376
    %378 = vmatmul.bf16.gmra.mxu0 %v253
    %v379 = vpop.f32.mrf.mxu0
    %v380 = vadd.f32 0.0, %v379
    %v381 = vpop.f32.mrf.mxu0
    %v382 = vadd.f32 0.0, %v381
    %383 = vdwg.mxu0
    %v384 = vmax.f32 %v278, %v283
    %v385 = vmax.f32 %v307, %v312
    %v386 = vmax.f32 %v336, %v341
    %v387 = vmax.f32 %v365, %v370
    %v388 = vmax.f32 %v280, %v285
    %v389 = vmax.f32 %v309, %v314
    %v390 = vmax.f32 %v338, %v343
    %v391 = vmax.f32 %v367, %v372
    %v392 = vmax.f32 %v288, %v293
    %v393 = vmax.f32 %v317, %v322
    %v394 = vmax.f32 %v346, %v351
    %v395 = vmax.f32 %v375, %v380
    %v396 = vmax.f32 %v290, %v295
    %v397 = vmax.f32 %v319, %v324
    %v398 = vmax.f32 %v348, %v353
    %v399 = vmax.f32 %v377, %v382
    %v400 = vmax.f32 %v384, %v392
    %v401 = vmax.f32 %v385, %v393
    %v402 = vmax.f32 %v386, %v394
    %v403 = vmax.f32 %v387, %v395
    %v404 = vmax.f32 %v388, %v396
    %v405 = vmax.f32 %v389, %v397
    %v406 = vmax.f32 %v390, %v398
    %v407 = vmax.f32 %v391, %v399
    %v408 = vld [vmem:[%s2] sm:$0xf]
    %v410 = vperm.slane %v408, 0
    %v411 = vperm.slane %v408, 1
    %v412 = vperm.slane %v408, 2
    %v413 = vperm.slane %v408, 3
    %v418 = vadd.f32 %v400, %v410
    %v419 = vadd.f32 %v401, %v411
    %v420 = vadd.f32 %v402, %v412
    %v421 = vadd.f32 %v403, %v413
    %v422 = vadd.f32 %v404, %v410
    %v423 = vadd.f32 %v405, %v411
    %v424 = vadd.f32 %v406, %v412
    %v425 = vadd.f32 %v407, %v413
    %v426 = vmax.f32 %v418, 0.0
    %v427 = vmax.f32 %v419, 0.0
    %v428 = vmax.f32 %v420, 0.0
    %v429 = vmax.f32 %v421, 0.0
    %v430 = vmax.f32 %v422, 0.0
    %v431 = vmax.f32 %v423, 0.0
    %v432 = vmax.f32 %v424, 0.0
    %v433 = vmax.f32 %v425, 0.0
    %v434 = vpack.c.bf16 %v430, %v426
    %v435 = vpack.c.bf16 %v431, %v427
    %v436 = vpack.c.bf16 %v432, %v428
    %v437 = vpack.c.bf16 %v433, %v429
    %v438 = vld [vmem:[%s3] sm:$0xff]
    %v439 = vld [vmem:[%s3 + $0x8] sm:$0xff]
    %v440 = vld [vmem:[%s3 + $0x10] sm:$0xff]
    %v441 = vld [vmem:[%s3 + $0x18] sm:$0xff]
    %v442 = vld [vmem:[%s3 + $0x20] sm:$0xff]
    %v443 = vld [vmem:[%s3 + $0x28] sm:$0xff]
    %v444 = vld [vmem:[%s3 + $0x30] sm:$0xff]
    %v445 = vld [vmem:[%s3 + $0x38] sm:$0xff]
    %v446 = vld [vmem:[%s3 + $0x40] sm:$0xff]
    %v447 = vld [vmem:[%s3 + $0x48] sm:$0xff]
    %v448 = vld [vmem:[%s3 + $0x50] sm:$0xff]
    %v449 = vld [vmem:[%s3 + $0x58] sm:$0xff]
    %v450 = vld [vmem:[%s3 + $0x60] sm:$0xff]
    %v451 = vld [vmem:[%s3 + $0x68] sm:$0xff]
    %v452 = vld [vmem:[%s3 + $0x70] sm:$0xff]
    %v453 = vld [vmem:[%s3 + $0x78] sm:$0xff]
    %v454 = vld [vmem:[%s3 + $0x80] sm:$0xff]
    %v455 = vld [vmem:[%s3 + $0x88] sm:$0xff]
    %v456 = vld [vmem:[%s3 + $0x90] sm:$0xff]
    %v457 = vld [vmem:[%s3 + $0x98] sm:$0xff]
    %v458 = vld [vmem:[%s3 + $0xa0] sm:$0xff]
    %v459 = vld [vmem:[%s3 + $0xa8] sm:$0xff]
    %v460 = vld [vmem:[%s3 + $0xb0] sm:$0xff]
    %v461 = vld [vmem:[%s3 + $0xb8] sm:$0xff]
    %v462 = vld [vmem:[%s3 + $0xc0] sm:$0xff]
    %v463 = vld [vmem:[%s3 + $0xc8] sm:$0xff]
    %v464 = vld [vmem:[%s3 + $0xd0] sm:$0xff]
    %v465 = vld [vmem:[%s3 + $0xd8] sm:$0xff]
    %v466 = vld [vmem:[%s3 + $0xe0] sm:$0xff]
    %v467 = vld [vmem:[%s3 + $0xe8] sm:$0xff]
    %v468 = vld [vmem:[%s3 + $0xf0] sm:$0xff]
    %v469 = vld [vmem:[%s3 + $0xf8] sm:$0xff]
    %v470 = vld [vmem:[%s3 + $0x100] sm:$0xff]
    %v471 = vld [vmem:[%s3 + $0x108] sm:$0xff]
    %v472 = vld [vmem:[%s3 + $0x110] sm:$0xff]
    %v473 = vld [vmem:[%s3 + $0x118] sm:$0xff]
    %v474 = vld [vmem:[%s3 + $0x120] sm:$0xff]
    %v475 = vld [vmem:[%s3 + $0x128] sm:$0xff]
    %v476 = vld [vmem:[%s3 + $0x130] sm:$0xff]
    %v477 = vld [vmem:[%s3 + $0x138] sm:$0xff]
    %v478 = vld [vmem:[%s3 + $0x140] sm:$0xff]
    %v479 = vld [vmem:[%s3 + $0x148] sm:$0xff]
    %v480 = vld [vmem:[%s3 + $0x150] sm:$0xff]
    %v481 = vld [vmem:[%s3 + $0x158] sm:$0xff]
    %v482 = vld [vmem:[%s3 + $0x160] sm:$0xff]
    %v483 = vld [vmem:[%s3 + $0x168] sm:$0xff]
    %v484 = vld [vmem:[%s3 + $0x170] sm:$0xff]
    %v485 = vld [vmem:[%s3 + $0x178] sm:$0xff]
    %v486 = vld [vmem:[%s3 + $0x180] sm:$0xff]
    %v487 = vld [vmem:[%s3 + $0x188] sm:$0xff]
    %v488 = vld [vmem:[%s3 + $0x190] sm:$0xff]
    %v489 = vld [vmem:[%s3 + $0x198] sm:$0xff]
    %v490 = vld [vmem:[%s3 + $0x1a0] sm:$0xff]
    %v491 = vld [vmem:[%s3 + $0x1a8] sm:$0xff]
    %v492 = vld [vmem:[%s3 + $0x1b0] sm:$0xff]
    %v493 = vld [vmem:[%s3 + $0x1b8] sm:$0xff]
    %v494 = vld [vmem:[%s3 + $0x1c0] sm:$0xff]
    %v495 = vld [vmem:[%s3 + $0x1c8] sm:$0xff]
    %v496 = vld [vmem:[%s3 + $0x1d0] sm:$0xff]
    %v497 = vld [vmem:[%s3 + $0x1d8] sm:$0xff]
    %v498 = vld [vmem:[%s3 + $0x1e0] sm:$0xff]
    %v499 = vld [vmem:[%s3 + $0x1e8] sm:$0xff]
    %v500 = vld [vmem:[%s3 + $0x1f0] sm:$0xff]
    %v501 = vld [vmem:[%s3 + $0x1f8] sm:$0xff]
    %v502 = vld [vmem:[%s4] sm:$0x3]
    %v504 = vperm.slane %v502, 0
    %v505 = vperm.slane %v502, 1
    %v572 = vunpack.c.l.b16 %v438
    %v573 = vunpack.c.h.b16 %v438
    %v574 = vunpack.c.l.b16 %v439
    %v575 = vunpack.c.h.b16 %v439
    %v576 = vunpack.c.l.b16 %v440
    %v577 = vunpack.c.h.b16 %v440
    %v578 = vunpack.c.l.b16 %v441
    %v579 = vunpack.c.h.b16 %v441
    %v580 = vunpack.c.l.b16 %v442
    %v581 = vunpack.c.h.b16 %v442
    %v582 = vunpack.c.l.b16 %v443
    %v583 = vunpack.c.h.b16 %v443
    %v584 = vunpack.c.l.b16 %v444
    %v585 = vunpack.c.h.b16 %v444
    %v586 = vunpack.c.l.b16 %v445
    %v587 = vunpack.c.h.b16 %v445
    %v588 = vunpack.c.l.b16 %v446
    %v589 = vunpack.c.h.b16 %v446
    %v590 = vunpack.c.l.b16 %v447
    %v591 = vunpack.c.h.b16 %v447
    %v592 = vunpack.c.l.b16 %v448
    %v593 = vunpack.c.h.b16 %v448
    %v594 = vunpack.c.l.b16 %v449
    %v595 = vunpack.c.h.b16 %v449
    %v596 = vunpack.c.l.b16 %v450
    %v597 = vunpack.c.h.b16 %v450
    %v598 = vunpack.c.l.b16 %v451
    %v599 = vunpack.c.h.b16 %v451
    %v600 = vunpack.c.l.b16 %v452
    %v601 = vunpack.c.h.b16 %v452
    %v602 = vunpack.c.l.b16 %v453
    %v603 = vunpack.c.h.b16 %v453
    %v604 = vunpack.c.l.b16 %v454
    %v605 = vunpack.c.h.b16 %v454
    %v606 = vunpack.c.l.b16 %v455
    %v607 = vunpack.c.h.b16 %v455
    %v608 = vunpack.c.l.b16 %v456
    %v609 = vunpack.c.h.b16 %v456
    %v610 = vunpack.c.l.b16 %v457
    %v611 = vunpack.c.h.b16 %v457
    %v612 = vunpack.c.l.b16 %v458
    %v613 = vunpack.c.h.b16 %v458
    %v614 = vunpack.c.l.b16 %v459
    %v615 = vunpack.c.h.b16 %v459
    %v616 = vunpack.c.l.b16 %v460
    %v617 = vunpack.c.h.b16 %v460
    %v618 = vunpack.c.l.b16 %v461
    %v619 = vunpack.c.h.b16 %v461
    %v620 = vunpack.c.l.b16 %v462
    %v621 = vunpack.c.h.b16 %v462
    %v622 = vunpack.c.l.b16 %v463
    %v623 = vunpack.c.h.b16 %v463
    %v624 = vunpack.c.l.b16 %v464
    %v625 = vunpack.c.h.b16 %v464
    %v626 = vunpack.c.l.b16 %v465
    %v627 = vunpack.c.h.b16 %v465
    %v628 = vunpack.c.l.b16 %v466
    %v629 = vunpack.c.h.b16 %v466
    %v630 = vunpack.c.l.b16 %v467
    %v631 = vunpack.c.h.b16 %v467
    %v632 = vunpack.c.l.b16 %v468
    %v633 = vunpack.c.h.b16 %v468
    %v634 = vunpack.c.l.b16 %v469
    %v635 = vunpack.c.h.b16 %v469
    %v636 = vunpack.c.l.b16 %v470
    %v637 = vunpack.c.h.b16 %v470
    %v638 = vunpack.c.l.b16 %v471
    %v639 = vunpack.c.h.b16 %v471
    %v640 = vunpack.c.l.b16 %v472
    %v641 = vunpack.c.h.b16 %v472
    %v642 = vunpack.c.l.b16 %v473
    %v643 = vunpack.c.h.b16 %v473
    %v644 = vunpack.c.l.b16 %v474
    %v645 = vunpack.c.h.b16 %v474
    %v646 = vunpack.c.l.b16 %v475
    %v647 = vunpack.c.h.b16 %v475
    %v648 = vunpack.c.l.b16 %v476
    %v649 = vunpack.c.h.b16 %v476
    %v650 = vunpack.c.l.b16 %v477
    %v651 = vunpack.c.h.b16 %v477
    %v652 = vunpack.c.l.b16 %v478
    %v653 = vunpack.c.h.b16 %v478
    %v654 = vunpack.c.l.b16 %v479
    %v655 = vunpack.c.h.b16 %v479
    %v656 = vunpack.c.l.b16 %v480
    %v657 = vunpack.c.h.b16 %v480
    %v658 = vunpack.c.l.b16 %v481
    %v659 = vunpack.c.h.b16 %v481
    %v660 = vunpack.c.l.b16 %v482
    %v661 = vunpack.c.h.b16 %v482
    %v662 = vunpack.c.l.b16 %v483
    %v663 = vunpack.c.h.b16 %v483
    %v664 = vunpack.c.l.b16 %v484
    %v665 = vunpack.c.h.b16 %v484
    %v666 = vunpack.c.l.b16 %v485
    %v667 = vunpack.c.h.b16 %v485
    %v668 = vunpack.c.l.b16 %v486
    %v669 = vunpack.c.h.b16 %v486
    %v670 = vunpack.c.l.b16 %v487
    %v671 = vunpack.c.h.b16 %v487
    %v672 = vunpack.c.l.b16 %v488
    %v673 = vunpack.c.h.b16 %v488
    %v674 = vunpack.c.l.b16 %v489
    %v675 = vunpack.c.h.b16 %v489
    %v676 = vunpack.c.l.b16 %v490
    %v677 = vunpack.c.h.b16 %v490
    %v678 = vunpack.c.l.b16 %v491
    %v679 = vunpack.c.h.b16 %v491
    %v680 = vunpack.c.l.b16 %v492
    %v681 = vunpack.c.h.b16 %v492
    %v682 = vunpack.c.l.b16 %v493
    %v683 = vunpack.c.h.b16 %v493
    %v684 = vunpack.c.l.b16 %v494
    %v685 = vunpack.c.h.b16 %v494
    %v686 = vunpack.c.l.b16 %v495
    %v687 = vunpack.c.h.b16 %v495
    %v688 = vunpack.c.l.b16 %v496
    %v689 = vunpack.c.h.b16 %v496
    %v690 = vunpack.c.l.b16 %v497
    %v691 = vunpack.c.h.b16 %v497
    %v692 = vunpack.c.l.b16 %v498
    %v693 = vunpack.c.h.b16 %v498
    %v694 = vunpack.c.l.b16 %v499
    %v695 = vunpack.c.h.b16 %v499
    %v696 = vunpack.c.l.b16 %v500
    %v697 = vunpack.c.h.b16 %v500
    %v698 = vunpack.c.l.b16 %v501
    %v699 = vunpack.c.h.b16 %v501
    %v700 = vpack.c.b16 %v574, %v572
    %v701 = vpack.c.b16 %v575, %v573
    %v702 = vpack.c.b16 %v578, %v576
    %v703 = vpack.c.b16 %v579, %v577
    %v704 = vpack.c.b16 %v582, %v580
    %v705 = vpack.c.b16 %v583, %v581
    %v706 = vpack.c.b16 %v586, %v584
    %v707 = vpack.c.b16 %v587, %v585
    %v708 = vpack.c.b16 %v590, %v588
    %v709 = vpack.c.b16 %v591, %v589
    %v710 = vpack.c.b16 %v594, %v592
    %v711 = vpack.c.b16 %v595, %v593
    %v712 = vpack.c.b16 %v598, %v596
    %v713 = vpack.c.b16 %v599, %v597
    %v714 = vpack.c.b16 %v602, %v600
    %v715 = vpack.c.b16 %v603, %v601
    %v716 = vpack.c.b16 %v606, %v604
    %v717 = vpack.c.b16 %v607, %v605
    %v718 = vpack.c.b16 %v610, %v608
    %v719 = vpack.c.b16 %v611, %v609
    %v720 = vpack.c.b16 %v614, %v612
    %v721 = vpack.c.b16 %v615, %v613
    %v722 = vpack.c.b16 %v618, %v616
    %v723 = vpack.c.b16 %v619, %v617
    %v724 = vpack.c.b16 %v622, %v620
    %v725 = vpack.c.b16 %v623, %v621
    %v726 = vpack.c.b16 %v626, %v624
    %v727 = vpack.c.b16 %v627, %v625
    %v728 = vpack.c.b16 %v630, %v628
    %v729 = vpack.c.b16 %v631, %v629
    %v730 = vpack.c.b16 %v634, %v632
    %v731 = vpack.c.b16 %v635, %v633
    %v732 = vpack.c.b16 %v638, %v636
    %v733 = vpack.c.b16 %v639, %v637
    %v734 = vpack.c.b16 %v642, %v640
    %v735 = vpack.c.b16 %v643, %v641
    %v736 = vpack.c.b16 %v646, %v644
    %v737 = vpack.c.b16 %v647, %v645
    %v738 = vpack.c.b16 %v650, %v648
    %v739 = vpack.c.b16 %v651, %v649
    %v740 = vpack.c.b16 %v654, %v652
    %v741 = vpack.c.b16 %v655, %v653
    %v742 = vpack.c.b16 %v658, %v656
    %v743 = vpack.c.b16 %v659, %v657
    %v744 = vpack.c.b16 %v662, %v660
    %v745 = vpack.c.b16 %v663, %v661
    %v746 = vpack.c.b16 %v666, %v664
    %v747 = vpack.c.b16 %v667, %v665
    %v748 = vpack.c.b16 %v670, %v668
    %v749 = vpack.c.b16 %v671, %v669
    %v750 = vpack.c.b16 %v674, %v672
    %v751 = vpack.c.b16 %v675, %v673
    %v752 = vpack.c.b16 %v678, %v676
    %v753 = vpack.c.b16 %v679, %v677
    %v754 = vpack.c.b16 %v682, %v680
    %v755 = vpack.c.b16 %v683, %v681
    %v756 = vpack.c.b16 %v686, %v684
    %v757 = vpack.c.b16 %v687, %v685
    %v758 = vpack.c.b16 %v690, %v688
    %v759 = vpack.c.b16 %v691, %v689
    %v760 = vpack.c.b16 %v694, %v692
    %v761 = vpack.c.b16 %v695, %v693
    %v762 = vpack.c.b16 %v698, %v696
    %v763 = vpack.c.b16 %v699, %v697
    %828 = vmatpush.bf16.msra.mxu0 %v714
    %829 = vmatpush.bf16.msra.mxu0 %v712
    %830 = vmatpush.bf16.msra.mxu0 %v710
    %831 = vmatpush.bf16.msra.mxu0 %v708
    %832 = vmatpush.bf16.msra.mxu0 %v706
    %833 = vmatpush.bf16.msra.mxu0 %v704
    %834 = vmatpush.bf16.msra.mxu0 %v702
    %835 = vmatpush.bf16.msra.mxu0 %v700
    %836 = vmatmul.bf16.gmra.mxu0 %v434
    %v837 = vpop.f32.mrf.mxu0
    %v838 = vadd.f32 %v504, %v837
    %v839 = vpop.f32.mrf.mxu0
    %v840 = vadd.f32 %v504, %v839
    %841 = vdwg.mxu0
    %842 = vmatpush.bf16.msra.mxu0 %v730
    %843 = vmatpush.bf16.msra.mxu0 %v728
    %844 = vmatpush.bf16.msra.mxu0 %v726
    %845 = vmatpush.bf16.msra.mxu0 %v724
    %846 = vmatpush.bf16.msra.mxu0 %v722
    %847 = vmatpush.bf16.msra.mxu0 %v720
    %848 = vmatpush.bf16.msra.mxu0 %v718
    %849 = vmatpush.bf16.msra.mxu0 %v716
    %850 = vmatmul.bf16.gmra.mxu0 %v435
    %v851 = vpop.f32.mrf.mxu0
    %v852 = vadd.f32 %v838, %v851
    %v853 = vpop.f32.mrf.mxu0
    %v854 = vadd.f32 %v840, %v853
    %855 = vdwg.mxu0
    %856 = vmatpush.bf16.msra.mxu0 %v746
    %857 = vmatpush.bf16.msra.mxu0 %v744
    %858 = vmatpush.bf16.msra.mxu0 %v742
    %859 = vmatpush.bf16.msra.mxu0 %v740
    %860 = vmatpush.bf16.msra.mxu0 %v738
    %861 = vmatpush.bf16.msra.mxu0 %v736
    %862 = vmatpush.bf16.msra.mxu0 %v734
    %863 = vmatpush.bf16.msra.mxu0 %v732
    %864 = vmatmul.bf16.gmra.mxu0 %v436
    %v865 = vpop.f32.mrf.mxu0
    %v866 = vadd.f32 %v852, %v865
    %v867 = vpop.f32.mrf.mxu0
    %v868 = vadd.f32 %v854, %v867
    %869 = vdwg.mxu0
    %870 = vmatpush.bf16.msra.mxu0 %v762
    %871 = vmatpush.bf16.msra.mxu0 %v760
    %872 = vmatpush.bf16.msra.mxu0 %v758
    %873 = vmatpush.bf16.msra.mxu0 %v756
    %874 = vmatpush.bf16.msra.mxu0 %v754
    %875 = vmatpush.bf16.msra.mxu0 %v752
    %876 = vmatpush.bf16.msra.mxu0 %v750
    %877 = vmatpush.bf16.msra.mxu0 %v748
    %878 = vmatmul.bf16.gmra.mxu0 %v437
    %v879 = vpop.f32.mrf.mxu0
    %v880 = vadd.f32 %v866, %v879
    %v881 = vpop.f32.mrf.mxu0
    %v882 = vadd.f32 %v868, %v881
    %883 = vdwg.mxu0
    %884 = vmatpush.bf16.msra.mxu0 %v715
    %885 = vmatpush.bf16.msra.mxu0 %v713
    %886 = vmatpush.bf16.msra.mxu0 %v711
    %887 = vmatpush.bf16.msra.mxu0 %v709
    %888 = vmatpush.bf16.msra.mxu0 %v707
    %889 = vmatpush.bf16.msra.mxu0 %v705
    %890 = vmatpush.bf16.msra.mxu0 %v703
    %891 = vmatpush.bf16.msra.mxu0 %v701
    %892 = vmatmul.bf16.gmra.mxu0 %v434
    %v893 = vpop.f32.mrf.mxu0
    %v894 = vadd.f32 %v505, %v893
    %v895 = vpop.f32.mrf.mxu0
    %v896 = vadd.f32 %v505, %v895
    %897 = vdwg.mxu0
    %898 = vmatpush.bf16.msra.mxu0 %v731
    %899 = vmatpush.bf16.msra.mxu0 %v729
    %900 = vmatpush.bf16.msra.mxu0 %v727
    %901 = vmatpush.bf16.msra.mxu0 %v725
    %902 = vmatpush.bf16.msra.mxu0 %v723
    %903 = vmatpush.bf16.msra.mxu0 %v721
    %904 = vmatpush.bf16.msra.mxu0 %v719
    %905 = vmatpush.bf16.msra.mxu0 %v717
    %906 = vmatmul.bf16.gmra.mxu0 %v435
    %v907 = vpop.f32.mrf.mxu0
    %v908 = vadd.f32 %v894, %v907
    %v909 = vpop.f32.mrf.mxu0
    %v910 = vadd.f32 %v896, %v909
    %911 = vdwg.mxu0
    %912 = vmatpush.bf16.msra.mxu0 %v747
    %913 = vmatpush.bf16.msra.mxu0 %v745
    %914 = vmatpush.bf16.msra.mxu0 %v743
    %915 = vmatpush.bf16.msra.mxu0 %v741
    %916 = vmatpush.bf16.msra.mxu0 %v739
    %917 = vmatpush.bf16.msra.mxu0 %v737
    %918 = vmatpush.bf16.msra.mxu0 %v735
    %919 = vmatpush.bf16.msra.mxu0 %v733
    %920 = vmatmul.bf16.gmra.mxu0 %v436
    %v921 = vpop.f32.mrf.mxu0
    %v922 = vadd.f32 %v908, %v921
    %v923 = vpop.f32.mrf.mxu0
    %v924 = vadd.f32 %v910, %v923
    %925 = vdwg.mxu0
    %926 = vmatpush.bf16.msra.mxu0 %v763
    %927 = vmatpush.bf16.msra.mxu0 %v761
    %928 = vmatpush.bf16.msra.mxu0 %v759
    %929 = vmatpush.bf16.msra.mxu0 %v757
    %930 = vmatpush.bf16.msra.mxu0 %v755
    %931 = vmatpush.bf16.msra.mxu0 %v753
    %932 = vmatpush.bf16.msra.mxu0 %v751
    %933 = vmatpush.bf16.msra.mxu0 %v749
    %934 = vmatmul.bf16.gmra.mxu0 %v437
    %v935 = vpop.f32.mrf.mxu0
    %v936 = vadd.f32 %v922, %v935
    %v937 = vpop.f32.mrf.mxu0
    %v938 = vadd.f32 %v924, %v937
    %939 = vdwg.mxu0
    %v940 = vld [vmem:[%s5] sm:$0xff]
    %v941 = vld [vmem:[%s5 + $0x8] sm:$0xff]
    %v942 = vld [vmem:[%s5 + $0x10] sm:$0xff]
    %v943 = vld [vmem:[%s5 + $0x18] sm:$0xff]
    %v944 = vld [vmem:[%s5 + $0x20] sm:$0xff]
    %v945 = vld [vmem:[%s5 + $0x28] sm:$0xff]
    %v946 = vld [vmem:[%s5 + $0x30] sm:$0xff]
    %v947 = vld [vmem:[%s5 + $0x38] sm:$0xff]
    %v948 = vlaneseq
    %v949 = vshrl.u32 %v948, 7
    %vm950 = vcmp.lt.s32.totalorder %v949, 2
    %v951 = vlaneseq
    %v952 = vand.u32 %v951, 127
    %vm953 = vcmp.ge.s32.totalorder %v952, 64
    %vm954 = vcmp.lt.s32.totalorder %v952, 96
    %vm955 = vmand %vm953, %vm954
    %v957 = vrot.slane %v938, 4
    %vm959 = vcmask 1041408
    %v960 = vsel %vm959, %v880, %v957
    %v961 = vtanh.pop %v960
    %v962 = vxor.u32 %v960, 2147483648
    %v963 = vmul.f32 %v962, 1.442695
    %v964 = vpow.pop %v963
    %v965 = vadd.f32 %v964, 1.0
    %v966 = vrcp.pop %v965
    %v967 = vmul.f32 %v965, %v966
    %v968 = vsub.f32 1.0, %v967
    %v969 = vmul.f32 %v966, %v968
    %v970 = vadd.f32 %v966, %v969
    %vm971 = vweird.f32 %v965
    %vm972 = vweird.f32 %v966
    %vm973 = vmor %vm971, %vm972
    %v974 = vsel %vm973, %v966, %v970
    %v975 = vand.u32 2147483647, %v965
    %vm976 = vcmp.eq.f32.partialorder %v975, 8.507059e+37
    %v977 = vand.u32 %v965, 2147483648
    %v978 = vor.u32 1.1754944e-38, %v977
    %v979 = vsel %vm976, %v978, %v974
    %v980 = vmul.f32 1.0, %v979
    %v981 = vsel %vm955, %v961, %v980
    %v982 = vmul.f32 %v981, 0.0
    %984 = vrot.lane.b32.xlu0 %v981, 64
    %v985 = vpop.permute.xlu0 %984
    %v987 = vmul.f32 %v981, %v985
    %989 = vrot.lane.b32.xlu0 %v987, 32
    %v990 = vpop.permute.xlu0 %989
    %v992 = vadd.f32 %v982, %v990
    %v993 = vtanh.pop %v992
    %995 = vrot.lane.b32.xlu0 %v993, 64
    %v996 = vpop.permute.xlu0 %995
    %v998 = vmul.f32 %v981, %v996
    %1000 = vrot.lane.b32.xlu0 %v998, 32
    %v1001 = vpop.permute.xlu0 %1000
    %vm1003 = vcmask 254976
    %1004 = vst.msk [vmem:[#allocation2] sm:$0x3] %vm1003, %v1001
    %vm1005 = vcmask 257026
    %1006 = vst.msk [vmem:[#allocation3 + $0xc] sm:$0xc] %vm1005, %v1001
    %v1008 = vrot.slane %v880, 2
    %v1010 = vrot.slane %v938, 2
    %v1012 = vsel %vm959, %v1008, %v1010
    %vm1013 = vcmask 261120
    %v1014 = vsel %vm1013, %v1001, 0
    %1016 = vmatpush.msra.mxu0 0.0
    %1017 = vmatpush.msra.mxu0 0.0
    %1018 = vmatpush.msra.mxu0 0.0
    %1019 = vmatpush.msra.mxu0 0.0
    %1020 = vmatpush.msra.mxu0 0.0
    %1021 = vmatpush.msra.mxu0 0.0
    %1022 = vmatpush.msra.mxu0 0.0
    %1023 = vmatpush.msra.mxu0 0.0
    %1024 = vmatpush.msra.mxu0 0.0
    %1025 = vmatpush.msra.mxu0 0.0
    %1026 = vmatpush.msra.mxu0 0.0
    %1027 = vmatpush.msra.mxu0 0.0
    %1028 = vmatpush.msra.mxu0 %v946
    %1029 = vmatpush.msra.mxu0 %v944
    %1030 = vmatpush.msra.mxu0 %v942
    %1031 = vmatpush.msra.mxu0 %v940
    %1032 = vmatmul.f32.gmra.mxu0 %v1014
    %v1033 = vpop.f32.mrf.mxu0
    %v1034 = vadd.f32 0.0, %v1033
    %1035 = vdwg.mxu0
    %1036 = vmatpush.msra.mxu0 0.0
    %1037 = vmatpush.msra.mxu0 0.0
    %1038 = vmatpush.msra.mxu0 0.0
    %1039 = vmatpush.msra.mxu0 0.0
    %1040 = vmatpush.msra.mxu0 0.0
    %1041 = vmatpush.msra.mxu0 0.0
    %1042 = vmatpush.msra.mxu0 0.0
    %1043 = vmatpush.msra.mxu0 0.0
    %1044 = vmatpush.msra.mxu0 0.0
    %1045 = vmatpush.msra.mxu0 0.0
    %1046 = vmatpush.msra.mxu0 0.0
    %1047 = vmatpush.msra.mxu0 0.0
    %1048 = vmatpush.msra.mxu0 %v947
    %1049 = vmatpush.msra.mxu0 %v945
    %1050 = vmatpush.msra.mxu0 %v943
    %1051 = vmatpush.msra.mxu0 %v941
    %1052 = vmatmul.f32.gmra.mxu0 %v1014
    %v1053 = vpop.f32.mrf.mxu0
    %v1054 = vadd.f32 0.0, %v1053
    %1055 = vdwg.mxu0
    %v1056 = vsel %vm950, %v1034, %v1054
    %v1057 = vadd.f32 %v1012, %v1056
    %v1058 = vtanh.pop %v1057
    %v1059 = vxor.u32 %v1057, 2147483648
    %v1060 = vmul.f32 %v1059, 1.442695
    %v1061 = vpow.pop %v1060
    %v1062 = vadd.f32 %v1061, 1.0
    %v1063 = vrcp.pop %v1062
    %v1064 = vmul.f32 %v1062, %v1063
    %v1065 = vsub.f32 1.0, %v1064
    %v1066 = vmul.f32 %v1063, %v1065
    %v1067 = vadd.f32 %v1063, %v1066
    %vm1068 = vweird.f32 %v1062
    %vm1069 = vweird.f32 %v1063
    %vm1070 = vmor %vm1068, %vm1069
    %v1071 = vsel %vm1070, %v1063, %v1067
    %v1072 = vand.u32 2147483647, %v1062
    %vm1073 = vcmp.eq.f32.partialorder %v1072, 8.507059e+37
    %v1074 = vand.u32 %v1062, 2147483648
    %v1075 = vor.u32 1.1754944e-38, %v1074
    %v1076 = vsel %vm1073, %v1075, %v1071
    %v1077 = vmul.f32 1.0, %v1076
    %v1078 = vsel %vm955, %v1058, %v1077
    %v1079 = vmul.f32 %v1078, %v992
    %1081 = vrot.lane.b32.xlu0 %v1078, 64
    %v1082 = vpop.permute.xlu0 %1081
    %v1084 = vmul.f32 %v1078, %v1082
    %1086 = vrot.lane.b32.xlu0 %v1084, 32
    %v1087 = vpop.permute.xlu0 %1086
    %v1089 = vadd.f32 %v1079, %v1087
    %v1090 = vtanh.pop %v1089
    %1092 = vrot.lane.b32.xlu0 %v1090, 64
    %v1093 = vpop.permute.xlu0 %1092
    %v1095 = vmul.f32 %v1078, %v1093
    %1097 = vrot.lane.b32.xlu0 %v1095, 32
    %v1098 = vpop.permute.xlu0 %1097
    %1100 = vst.msk [vmem:[#allocation2 + $0x2] sm:$0x3] %vm1003, %v1098
    %1101 = vst.msk [vmem:[#allocation3 + $0xa] sm:$0xc] %vm1005, %v1098
    %v1102 = vrot.slane %v880, 4
    %v1104 = vsel %vm959, %v1102, %v938
    %v1105 = vsel %vm1013, %v1098, 0
    %1107 = vmatpush.msra.mxu0 0.0
    %1108 = vmatpush.msra.mxu0 0.0
    %1109 = vmatpush.msra.mxu0 0.0
    %1110 = vmatpush.msra.mxu0 0.0
    %1111 = vmatpush.msra.mxu0 0.0
    %1112 = vmatpush.msra.mxu0 0.0
    %1113 = vmatpush.msra.mxu0 0.0
    %1114 = vmatpush.msra.mxu0 0.0
    %1115 = vmatpush.msra.mxu0 0.0
    %1116 = vmatpush.msra.mxu0 0.0
    %1117 = vmatpush.msra.mxu0 0.0
    %1118 = vmatpush.msra.mxu0 0.0
    %1119 = vmatpush.msra.mxu0 %v946
    %1120 = vmatpush.msra.mxu0 %v944
    %1121 = vmatpush.msra.mxu0 %v942
    %1122 = vmatpush.msra.mxu0 %v940
    %1123 = vmatmul.f32.gmra.mxu0 %v1105
    %v1124 = vpop.f32.mrf.mxu0
    %v1125 = vadd.f32 0.0, %v1124
    %1126 = vdwg.mxu0
    %1127 = vmatpush.msra.mxu0 0.0
    %1128 = vmatpush.msra.mxu0 0.0
    %1129 = vmatpush.msra.mxu0 0.0
    %1130 = vmatpush.msra.mxu0 0.0
    %1131 = vmatpush.msra.mxu0 0.0
    %1132 = vmatpush.msra.mxu0 0.0
    %1133 = vmatpush.msra.mxu0 0.0
    %1134 = vmatpush.msra.mxu0 0.0
    %1135 = vmatpush.msra.mxu0 0.0
    %1136 = vmatpush.msra.mxu0 0.0
    %1137 = vmatpush.msra.mxu0 0.0
    %1138 = vmatpush.msra.mxu0 0.0
    %1139 = vmatpush.msra.mxu0 %v947
    %1140 = vmatpush.msra.mxu0 %v945
    %1141 = vmatpush.msra.mxu0 %v943
    %1142 = vmatpush.msra.mxu0 %v941
    %1143 = vmatmul.f32.gmra.mxu0 %v1105
    %v1144 = vpop.f32.mrf.mxu0
    %v1145 = vadd.f32 0.0, %v1144
    %1146 = vdwg.mxu0
    %v1147 = vsel %vm950, %v1125, %v1145
    %v1148 = vadd.f32 %v1104, %v1147
    %v1149 = vtanh.pop %v1148
    %v1150 = vxor.u32 %v1148, 2147483648
    %v1151 = vmul.f32 %v1150, 1.442695
    %v1152 = vpow.pop %v1151
    %v1153 = vadd.f32 %v1152, 1.0
    %v1154 = vrcp.pop %v1153
    %v1155 = vmul.f32 %v1153, %v1154
    %v1156 = vsub.f32 1.0, %v1155
    %v1157 = vmul.f32 %v1154, %v1156
    %v1158 = vadd.f32 %v1154, %v1157
    %vm1159 = vweird.f32 %v1153
    %vm1160 = vweird.f32 %v1154
    %vm1161 = vmor %vm1159, %vm1160
    %v1162 = vsel %vm1161, %v1154, %v1158
    %v1163 = vand.u32 2147483647, %v1153
    %vm1164 = vcmp.eq.f32.partialorder %v1163, 8.507059e+37
    %v1165 = vand.u32 %v1153, 2147483648
    %v1166 = vor.u32 1.1754944e-38, %v1165
    %v1167 = vsel %vm1164, %v1166, %v1162
    %v1168 = vmul.f32 1.0, %v1167
    %v1169 = vsel %vm955, %v1149, %v1168
    %v1170 = vmul.f32 %v1169, %v1089
    %1172 = vrot.lane.b32.xlu0 %v1169, 64
    %v1173 = vpop.permute.xlu0 %1172
    %v1175 = vmul.f32 %v1169, %v1173
    %1177 = vrot.lane.b32.xlu0 %v1175, 32
    %v1178 = vpop.permute.xlu0 %1177
    %v1180 = vadd.f32 %v1170, %v1178
    %v1181 = vtanh.pop %v1180
    %1183 = vrot.lane.b32.xlu0 %v1181, 64
    %v1184 = vpop.permute.xlu0 %1183
    %v1186 = vmul.f32 %v1169, %v1184
    %1188 = vrot.lane.b32.xlu0 %v1186, 32
    %v1189 = vpop.permute.xlu0 %1188
    %1191 = vst.msk [vmem:[#allocation2 + $0x4] sm:$0x3] %vm1003, %v1189
    %1192 = vst.msk [vmem:[#allocation3 + $0x8] sm:$0xc] %vm1005, %v1189
    %v1193 = vrot.slane %v880, 6
    %v1195 = vrot.slane %v938, 6
    %v1197 = vsel %vm959, %v1193, %v1195
    %v1198 = vsel %vm1013, %v1189, 0
    %1200 = vmatpush.msra.mxu0 0.0
    %1201 = vmatpush.msra.mxu0 0.0
    %1202 = vmatpush.msra.mxu0 0.0
    %1203 = vmatpush.msra.mxu0 0.0
    %1204 = vmatpush.msra.mxu0 0.0
    %1205 = vmatpush.msra.mxu0 0.0
    %1206 = vmatpush.msra.mxu0 0.0
    %1207 = vmatpush.msra.mxu0 0.0
    %1208 = vmatpush.msra.mxu0 0.0
    %1209 = vmatpush.msra.mxu0 0.0
    %1210 = vmatpush.msra.mxu0 0.0
    %1211 = vmatpush.msra.mxu0 0.0
    %1212 = vmatpush.msra.mxu0 %v946
    %1213 = vmatpush.msra.mxu0 %v944
    %1214 = vmatpush.msra.mxu0 %v942
    %1215 = vmatpush.msra.mxu0 %v940
    %1216 = vmatmul.f32.gmra.mxu0 %v1198
    %v1217 = vpop.f32.mrf.mxu0
    %v1218 = vadd.f32 0.0, %v1217
    %1219 = vdwg.mxu0
    %1220 = vmatpush.msra.mxu0 0.0
    %1221 = vmatpush.msra.mxu0 0.0
    %1222 = vmatpush.msra.mxu0 0.0
    %1223 = vmatpush.msra.mxu0 0.0
    %1224 = vmatpush.msra.mxu0 0.0
    %1225 = vmatpush.msra.mxu0 0.0
    %1226 = vmatpush.msra.mxu0 0.0
    %1227 = vmatpush.msra.mxu0 0.0
    %1228 = vmatpush.msra.mxu0 0.0
    %1229 = vmatpush.msra.mxu0 0.0
    %1230 = vmatpush.msra.mxu0 0.0
    %1231 = vmatpush.msra.mxu0 0.0
    %1232 = vmatpush.msra.mxu0 %v947
    %1233 = vmatpush.msra.mxu0 %v945
    %1234 = vmatpush.msra.mxu0 %v943
    %1235 = vmatpush.msra.mxu0 %v941
    %1236 = vmatmul.f32.gmra.mxu0 %v1198
    %v1237 = vpop.f32.mrf.mxu0
    %v1238 = vadd.f32 0.0, %v1237
    %1239 = vdwg.mxu0
    %v1240 = vsel %vm950, %v1218, %v1238
    %v1241 = vadd.f32 %v1197, %v1240
    %v1242 = vtanh.pop %v1241
    %v1243 = vxor.u32 %v1241, 2147483648
    %v1244 = vmul.f32 %v1243, 1.442695
    %v1245 = vpow.pop %v1244
    %v1246 = vadd.f32 %v1245, 1.0
    %v1247 = vrcp.pop %v1246
    %v1248 = vmul.f32 %v1246, %v1247
    %v1249 = vsub.f32 1.0, %v1248
    %v1250 = vmul.f32 %v1247, %v1249
    %v1251 = vadd.f32 %v1247, %v1250
    %vm1252 = vweird.f32 %v1246
    %vm1253 = vweird.f32 %v1247
    %vm1254 = vmor %vm1252, %vm1253
    %v1255 = vsel %vm1254, %v1247, %v1251
    %v1256 = vand.u32 2147483647, %v1246
    %vm1257 = vcmp.eq.f32.partialorder %v1256, 8.507059e+37
    %v1258 = vand.u32 %v1246, 2147483648
    %v1259 = vor.u32 1.1754944e-38, %v1258
    %v1260 = vsel %vm1257, %v1259, %v1255
    %v1261 = vmul.f32 1.0, %v1260
    %v1262 = vsel %vm955, %v1242, %v1261
    %v1263 = vmul.f32 %v1262, %v1180
    %1265 = vrot.lane.b32.xlu0 %v1262, 64
    %v1266 = vpop.permute.xlu0 %1265
    %v1268 = vmul.f32 %v1262, %v1266
    %1270 = vrot.lane.b32.xlu0 %v1268, 32
    %v1271 = vpop.permute.xlu0 %1270
    %v1273 = vadd.f32 %v1263, %v1271
    %v1274 = vtanh.pop %v1273
    %1276 = vrot.lane.b32.xlu0 %v1274, 64
    %v1277 = vpop.permute.xlu0 %1276
    %v1279 = vmul.f32 %v1262, %v1277
    %1281 = vrot.lane.b32.xlu0 %v1279, 32
    %v1282 = vpop.permute.xlu0 %1281
    %1284 = vst.msk [vmem:[#allocation2 + $0x6] sm:$0x3] %vm1003, %v1282
    %1285 = vst.msk [vmem:[#allocation3 + $0x6] sm:$0xc] %vm1005, %v1282
    %v1287 = vrot.slane %v936, 4
    %v1289 = vsel %vm959, %v882, %v1287
    %v1290 = vsel %vm1013, %v1282, 0
    %1292 = vmatpush.msra.mxu0 0.0
    %1293 = vmatpush.msra.mxu0 0.0
    %1294 = vmatpush.msra.mxu0 0.0
    %1295 = vmatpush.msra.mxu0 0.0
    %1296 = vmatpush.msra.mxu0 0.0
    %1297 = vmatpush.msra.mxu0 0.0
    %1298 = vmatpush.msra.mxu0 0.0
    %1299 = vmatpush.msra.mxu0 0.0
    %1300 = vmatpush.msra.mxu0 0.0
    %1301 = vmatpush.msra.mxu0 0.0
    %1302 = vmatpush.msra.mxu0 0.0
    %1303 = vmatpush.msra.mxu0 0.0
    %1304 = vmatpush.msra.mxu0 %v946
    %1305 = vmatpush.msra.mxu0 %v944
    %1306 = vmatpush.msra.mxu0 %v942
    %1307 = vmatpush.msra.mxu0 %v940
    %1308 = vmatmul.f32.gmra.mxu0 %v1290
    %v1309 = vpop.f32.mrf.mxu0
    %v1310 = vadd.f32 0.0, %v1309
    %1311 = vdwg.mxu0
    %1312 = vmatpush.msra.mxu0 0.0
    %1313 = vmatpush.msra.mxu0 0.0
    %1314 = vmatpush.msra.mxu0 0.0
    %1315 = vmatpush.msra.mxu0 0.0
    %1316 = vmatpush.msra.mxu0 0.0
    %1317 = vmatpush.msra.mxu0 0.0
    %1318 = vmatpush.msra.mxu0 0.0
    %1319 = vmatpush.msra.mxu0 0.0
    %1320 = vmatpush.msra.mxu0 0.0
    %1321 = vmatpush.msra.mxu0 0.0
    %1322 = vmatpush.msra.mxu0 0.0
    %1323 = vmatpush.msra.mxu0 0.0
    %1324 = vmatpush.msra.mxu0 %v947
    %1325 = vmatpush.msra.mxu0 %v945
    %1326 = vmatpush.msra.mxu0 %v943
    %1327 = vmatpush.msra.mxu0 %v941
    %1328 = vmatmul.f32.gmra.mxu0 %v1290
    %v1329 = vpop.f32.mrf.mxu0
    %v1330 = vadd.f32 0.0, %v1329
    %1331 = vdwg.mxu0
    %v1332 = vsel %vm950, %v1310, %v1330
    %v1333 = vadd.f32 %v1289, %v1332
    %v1334 = vtanh.pop %v1333
    %v1335 = vxor.u32 %v1333, 2147483648
    %v1336 = vmul.f32 %v1335, 1.442695
    %v1337 = vpow.pop %v1336
    %v1338 = vadd.f32 %v1337, 1.0
    %v1339 = vrcp.pop %v1338
    %v1340 = vmul.f32 %v1338, %v1339
    %v1341 = vsub.f32 1.0, %v1340
    %v1342 = vmul.f32 %v1339, %v1341
    %v1343 = vadd.f32 %v1339, %v1342
    %vm1344 = vweird.f32 %v1338
    %vm1345 = vweird.f32 %v1339
    %vm1346 = vmor %vm1344, %vm1345
    %v1347 = vsel %vm1346, %v1339, %v1343
    %v1348 = vand.u32 2147483647, %v1338
    %vm1349 = vcmp.eq.f32.partialorder %v1348, 8.507059e+37
    %v1350 = vand.u32 %v1338, 2147483648
    %v1351 = vor.u32 1.1754944e-38, %v1350
    %v1352 = vsel %vm1349, %v1351, %v1347
    %v1353 = vmul.f32 1.0, %v1352
    %v1354 = vsel %vm955, %v1334, %v1353
    %v1355 = vmul.f32 %v1354, %v1273
    %1357 = vrot.lane.b32.xlu0 %v1354, 64
    %v1358 = vpop.permute.xlu0 %1357
    %v1360 = vmul.f32 %v1354, %v1358
    %1362 = vrot.lane.b32.xlu0 %v1360, 32
    %v1363 = vpop.permute.xlu0 %1362
    %v1365 = vadd.f32 %v1355, %v1363
    %v1366 = vtanh.pop %v1365
    %1368 = vrot.lane.b32.xlu0 %v1366, 64
    %v1369 = vpop.permute.xlu0 %1368
    %v1371 = vmul.f32 %v1354, %v1369
    %1373 = vrot.lane.b32.xlu0 %v1371, 32
    %v1374 = vpop.permute.xlu0 %1373
    %1376 = vst.msk [vmem:[#allocation2 + $0x8] sm:$0x3] %vm1003, %v1374
    %1377 = vst.msk [vmem:[#allocation3 + $0x4] sm:$0xc] %vm1005, %v1374
    %v1379 = vrot.slane %v882, 2
    %v1381 = vrot.slane %v936, 2
    %v1383 = vsel %vm959, %v1379, %v1381
    %v1384 = vsel %vm1013, %v1374, 0
    %1386 = vmatpush.msra.mxu0 0.0
    %1387 = vmatpush.msra.mxu0 0.0
    %1388 = vmatpush.msra.mxu0 0.0
    %1389 = vmatpush.msra.mxu0 0.0
    %1390 = vmatpush.msra.mxu0 0.0
    %1391 = vmatpush.msra.mxu0 0.0
    %1392 = vmatpush.msra.mxu0 0.0
    %1393 = vmatpush.msra.mxu0 0.0
    %1394 = vmatpush.msra.mxu0 0.0
    %1395 = vmatpush.msra.mxu0 0.0
    %1396 = vmatpush.msra.mxu0 0.0
    %1397 = vmatpush.msra.mxu0 0.0
    %1398 = vmatpush.msra.mxu0 %v946
    %1399 = vmatpush.msra.mxu0 %v944
    %1400 = vmatpush.msra.mxu0 %v942
    %1401 = vmatpush.msra.mxu0 %v940
    %1402 = vmatmul.f32.gmra.mxu0 %v1384
    %v1403 = vpop.f32.mrf.mxu0
    %v1404 = vadd.f32 0.0, %v1403
    %1405 = vdwg.mxu0
    %1406 = vmatpush.msra.mxu0 0.0
    %1407 = vmatpush.msra.mxu0 0.0
    %1408 = vmatpush.msra.mxu0 0.0
    %1409 = vmatpush.msra.mxu0 0.0
    %1410 = vmatpush.msra.mxu0 0.0
    %1411 = vmatpush.msra.mxu0 0.0
    %1412 = vmatpush.msra.mxu0 0.0
    %1413 = vmatpush.msra.mxu0 0.0
    %1414 = vmatpush.msra.mxu0 0.0
    %1415 = vmatpush.msra.mxu0 0.0
    %1416 = vmatpush.msra.mxu0 0.0
    %1417 = vmatpush.msra.mxu0 0.0
    %1418 = vmatpush.msra.mxu0 %v947
    %1419 = vmatpush.msra.mxu0 %v945
    %1420 = vmatpush.msra.mxu0 %v943
    %1421 = vmatpush.msra.mxu0 %v941
    %1422 = vmatmul.f32.gmra.mxu0 %v1384
    %v1423 = vpop.f32.mrf.mxu0
    %v1424 = vadd.f32 0.0, %v1423
    %1425 = vdwg.mxu0
    %v1426 = vsel %vm950, %v1404, %v1424
    %v1427 = vadd.f32 %v1383, %v1426
    %v1428 = vtanh.pop %v1427
    %v1429 = vxor.u32 %v1427, 2147483648
    %v1430 = vmul.f32 %v1429, 1.442695
    %v1431 = vpow.pop %v1430
    %v1432 = vadd.f32 %v1431, 1.0
    %v1433 = vrcp.pop %v1432
    %v1434 = vmul.f32 %v1432, %v1433
    %v1435 = vsub.f32 1.0, %v1434
    %v1436 = vmul.f32 %v1433, %v1435
    %v1437 = vadd.f32 %v1433, %v1436
    %vm1438 = vweird.f32 %v1432
    %vm1439 = vweird.f32 %v1433
    %vm1440 = vmor %vm1438, %vm1439
    %v1441 = vsel %vm1440, %v1433, %v1437
    %v1442 = vand.u32 2147483647, %v1432
    %vm1443 = vcmp.eq.f32.partialorder %v1442, 8.507059e+37
    %v1444 = vand.u32 %v1432, 2147483648
    %v1445 = vor.u32 1.1754944e-38, %v1444
    %v1446 = vsel %vm1443, %v1445, %v1441
    %v1447 = vmul.f32 1.0, %v1446
    %v1448 = vsel %vm955, %v1428, %v1447
    %v1449 = vmul.f32 %v1448, %v1365
    %1451 = vrot.lane.b32.xlu0 %v1448, 64
    %v1452 = vpop.permute.xlu0 %1451
    %v1454 = vmul.f32 %v1448, %v1452
    %1456 = vrot.lane.b32.xlu0 %v1454, 32
    %v1457 = vpop.permute.xlu0 %1456
    %v1459 = vadd.f32 %v1449, %v1457
    %v1460 = vtanh.pop %v1459
    %1462 = vrot.lane.b32.xlu0 %v1460, 64
    %v1463 = vpop.permute.xlu0 %1462
    %v1465 = vmul.f32 %v1448, %v1463
    %1467 = vrot.lane.b32.xlu0 %v1465, 32
    %v1468 = vpop.permute.xlu0 %1467
    %1470 = vst.msk [vmem:[#allocation2 + $0xa] sm:$0x3] %vm1003, %v1468
    %1471 = vst.msk [vmem:[#allocation3 + $0x2] sm:$0xc] %vm1005, %v1468
    %v1472 = vrot.slane %v882, 4
    %v1474 = vsel %vm959, %v1472, %v936
    %v1475 = vsel %vm1013, %v1468, 0
    %1477 = vmatpush.msra.mxu0 0.0
    %1478 = vmatpush.msra.mxu0 0.0
    %1479 = vmatpush.msra.mxu0 0.0
    %1480 = vmatpush.msra.mxu0 0.0
    %1481 = vmatpush.msra.mxu0 0.0
    %1482 = vmatpush.msra.mxu0 0.0
    %1483 = vmatpush.msra.mxu0 0.0
    %1484 = vmatpush.msra.mxu0 0.0
    %1485 = vmatpush.msra.mxu0 0.0
    %1486 = vmatpush.msra.mxu0 0.0
    %1487 = vmatpush.msra.mxu0 0.0
    %1488 = vmatpush.msra.mxu0 0.0
    %1489 = vmatpush.msra.mxu0 %v946
    %1490 = vmatpush.msra.mxu0 %v944
    %1491 = vmatpush.msra.mxu0 %v942
    %1492 = vmatpush.msra.mxu0 %v940
    %1493 = vmatmul.f32.gmra.mxu0 %v1475
    %v1494 = vpop.f32.mrf.mxu0
    %v1495 = vadd.f32 0.0, %v1494
    %1496 = vdwg.mxu0
    %1497 = vmatpush.msra.mxu0 0.0
    %1498 = vmatpush.msra.mxu0 0.0
    %1499 = vmatpush.msra.mxu0 0.0
    %1500 = vmatpush.msra.mxu0 0.0
    %1501 = vmatpush.msra.mxu0 0.0
    %1502 = vmatpush.msra.mxu0 0.0
    %1503 = vmatpush.msra.mxu0 0.0
    %1504 = vmatpush.msra.mxu0 0.0
    %1505 = vmatpush.msra.mxu0 0.0
    %1506 = vmatpush.msra.mxu0 0.0
    %1507 = vmatpush.msra.mxu0 0.0
    %1508 = vmatpush.msra.mxu0 0.0
    %1509 = vmatpush.msra.mxu0 %v947
    %1510 = vmatpush.msra.mxu0 %v945
    %1511 = vmatpush.msra.mxu0 %v943
    %1512 = vmatpush.msra.mxu0 %v941
    %1513 = vmatmul.f32.gmra.mxu0 %v1475
    %v1514 = vpop.f32.mrf.mxu0
    %v1515 = vadd.f32 0.0, %v1514
    %1516 = vdwg.mxu0
    %v1517 = vsel %vm950, %v1495, %v1515
    %v1518 = vadd.f32 %v1474, %v1517
    %v1519 = vtanh.pop %v1518
    %v1520 = vxor.u32 %v1518, 2147483648
    %v1521 = vmul.f32 %v1520, 1.442695
    %v1522 = vpow.pop %v1521
    %v1523 = vadd.f32 %v1522, 1.0
    %v1524 = vrcp.pop %v1523
    %v1525 = vmul.f32 %v1523, %v1524
    %v1526 = vsub.f32 1.0, %v1525
    %v1527 = vmul.f32 %v1524, %v1526
    %v1528 = vadd.f32 %v1524, %v1527
    %vm1529 = vweird.f32 %v1523
    %vm1530 = vweird.f32 %v1524
    %vm1531 = vmor %vm1529, %vm1530
    %v1532 = vsel %vm1531, %v1524, %v1528
    %v1533 = vand.u32 2147483647, %v1523
    %vm1534 = vcmp.eq.f32.partialorder %v1533, 8.507059e+37
    %v1535 = vand.u32 %v1523, 2147483648
    %v1536 = vor.u32 1.1754944e-38, %v1535
    %v1537 = vsel %vm1534, %v1536, %v1532
    %v1538 = vmul.f32 1.0, %v1537
    %v1539 = vsel %vm955, %v1519, %v1538
    %v1540 = vmul.f32 %v1539, %v1459
    %1542 = vrot.lane.b32.xlu0 %v1539, 64
    %v1543 = vpop.permute.xlu0 %1542
    %v1545 = vmul.f32 %v1539, %v1543
    %1547 = vrot.lane.b32.xlu0 %v1545, 32
    %v1548 = vpop.permute.xlu0 %1547
    %v1550 = vadd.f32 %v1540, %v1548
    %v1551 = vtanh.pop %v1550
    %1553 = vrot.lane.b32.xlu0 %v1551, 64
    %v1554 = vpop.permute.xlu0 %1553
    %v1556 = vmul.f32 %v1539, %v1554
    %1558 = vrot.lane.b32.xlu0 %v1556, 32
    %v1559 = vpop.permute.xlu0 %1558
    %1561 = vst.msk [vmem:[#allocation2 + $0xc] sm:$0x3] %vm1003, %v1559
    %1562 = vst.msk [vmem:[#allocation3] sm:$0xc] %vm1005, %v1559
    %v1563 = vrot.slane %v882, 6
    %v1565 = vrot.slane %v936, 6
    %v1567 = vsel %vm959, %v1563, %v1565
    %v1568 = vsel %vm1013, %v1559, 0
    %1570 = vmatpush.msra.mxu0 0.0
    %1571 = vmatpush.msra.mxu0 0.0
    %1572 = vmatpush.msra.mxu0 0.0
    %1573 = vmatpush.msra.mxu0 0.0
    %1574 = vmatpush.msra.mxu0 0.0
    %1575 = vmatpush.msra.mxu0 0.0
    %1576 = vmatpush.msra.mxu0 0.0
    %1577 = vmatpush.msra.mxu0 0.0
    %1578 = vmatpush.msra.mxu0 0.0
    %1579 = vmatpush.msra.mxu0 0.0
    %1580 = vmatpush.msra.mxu0 0.0
    %1581 = vmatpush.msra.mxu0 0.0
    %1582 = vmatpush.msra.mxu0 %v946
    %1583 = vmatpush.msra.mxu0 %v944
    %1584 = vmatpush.msra.mxu0 %v942
    %1585 = vmatpush.msra.mxu0 %v940
    %1586 = vmatmul.f32.gmra.mxu0 %v1568
    %v1587 = vpop.f32.mrf.mxu0
    %v1588 = vadd.f32 0.0, %v1587
    %1589 = vdwg.mxu0
    %1590 = vmatpush.msra.mxu0 0.0
    %1591 = vmatpush.msra.mxu0 0.0
    %1592 = vmatpush.msra.mxu0 0.0
    %1593 = vmatpush.msra.mxu0 0.0
    %1594 = vmatpush.msra.mxu0 0.0
    %1595 = vmatpush.msra.mxu0 0.0
    %1596 = vmatpush.msra.mxu0 0.0
    %1597 = vmatpush.msra.mxu0 0.0
    %1598 = vmatpush.msra.mxu0 0.0
    %1599 = vmatpush.msra.mxu0 0.0
    %1600 = vmatpush.msra.mxu0 0.0
    %1601 = vmatpush.msra.mxu0 0.0
    %1602 = vmatpush.msra.mxu0 %v947
    %1603 = vmatpush.msra.mxu0 %v945
    %1604 = vmatpush.msra.mxu0 %v943
    %1605 = vmatpush.msra.mxu0 %v941
    %1606 = vmatmul.f32.gmra.mxu0 %v1568
    %v1607 = vpop.f32.mrf.mxu0
    %v1608 = vadd.f32 0.0, %v1607
    %1609 = vdwg.mxu0
    %v1610 = vsel %vm950, %v1588, %v1608
    %v1611 = vadd.f32 %v1567, %v1610
    %v1612 = vtanh.pop %v1611
    %v1613 = vxor.u32 %v1611, 2147483648
    %v1614 = vmul.f32 %v1613, 1.442695
    %v1615 = vpow.pop %v1614
    %v1616 = vadd.f32 %v1615, 1.0
    %v1617 = vrcp.pop %v1616
    %v1618 = vmul.f32 %v1616, %v1617
    %v1619 = vsub.f32 1.0, %v1618
    %v1620 = vmul.f32 %v1617, %v1619
    %v1621 = vadd.f32 %v1617, %v1620
    %vm1622 = vweird.f32 %v1616
    %vm1623 = vweird.f32 %v1617
    %vm1624 = vmor %vm1622, %vm1623
    %v1625 = vsel %vm1624, %v1617, %v1621
    %v1626 = vand.u32 2147483647, %v1616
    %vm1627 = vcmp.eq.f32.partialorder %v1626, 8.507059e+37
    %v1628 = vand.u32 %v1616, 2147483648
    %v1629 = vor.u32 1.1754944e-38, %v1628
    %v1630 = vsel %vm1627, %v1629, %v1625
    %v1631 = vmul.f32 1.0, %v1630
    %v1632 = vsel %vm955, %v1612, %v1631
    %v1633 = vmul.f32 %v1632, %v1550
    %1635 = vrot.lane.b32.xlu0 %v1632, 64
    %v1636 = vpop.permute.xlu0 %1635
    %v1638 = vmul.f32 %v1632, %v1636
    %1640 = vrot.lane.b32.xlu0 %v1638, 32
    %v1641 = vpop.permute.xlu0 %1640
    %v1643 = vadd.f32 %v1633, %v1641
    %v1644 = vtanh.pop %v1643
    %1646 = vrot.lane.b32.xlu0 %v1644, 64
    %v1647 = vpop.permute.xlu0 %1646
    %v1649 = vmul.f32 %v1632, %v1647
    %1651 = vrot.lane.b32.xlu0 %v1649, 32
    %v1652 = vpop.permute.xlu0 %1651
    %1654 = vst.msk [vmem:[#allocation2 + $0xe] sm:$0x3] %vm1003, %v1652
    %1655 = vst.msk [vmem:[#allocation3 - $0x2] sm:$0xc] %vm1005, %v1652
    %v1656 = vld [vmem:[#allocation2] sm:$0xff]
    %v1657 = vld [vmem:[#allocation2 + $0x8] sm:$0xff]
    %v1658 = vld [vmem:[%s6] sm:$0xff]
    %v1659 = vld [vmem:[%s6 + $0x8] sm:$0xff]
    %v1660 = vld [vmem:[%s6 + $0x10] sm:$0xff]
    %v1661 = vld [vmem:[%s6 + $0x18] sm:$0xff]
    %v1662 = vld [vmem:[#allocation3] sm:$0xff]
    %v1663 = vld [vmem:[#allocation3 + $0x8] sm:$0xff]
    %v1664 = vld [vmem:[%s6 + $0x20] sm:$0xff]
    %v1665 = vld [vmem:[%s6 + $0x28] sm:$0xff]
    %v1666 = vld [vmem:[%s6 + $0x30] sm:$0xff]
    %v1667 = vld [vmem:[%s6 + $0x38] sm:$0xff]
    %v1669 = vsel %vm1013, %v1662, 0
    %v1672 = vsel %vm1013, %v1663, 0
    %1674 = vmatpush.msra.mxu0 0.0
    %1675 = vmatpush.msra.mxu0 0.0
    %1676 = vmatpush.msra.mxu0 0.0
    %1677 = vmatpush.msra.mxu0 0.0
    %1678 = vmatpush.msra.mxu0 0.0
    %1679 = vmatpush.msra.mxu0 0.0
    %1680 = vmatpush.msra.mxu0 0.0
    %1681 = vmatpush.msra.mxu0 0.0
    %1682 = vmatpush.msra.mxu0 0.0
    %1683 = vmatpush.msra.mxu0 0.0
    %1684 = vmatpush.msra.mxu0 0.0
    %1685 = vmatpush.msra.mxu0 0.0
    %1686 = vmatpush.msra.mxu0 %v1667
    %1687 = vmatpush.msra.mxu0 %v1666
    %1688 = vmatpush.msra.mxu0 %v1665
    %1689 = vmatpush.msra.mxu0 %v1664
    %1690 = vmatmul.f32.gmra.mxu0 %v1669
    %v1691 = vpop.f32.mrf.mxu0
    %v1692 = vadd.f32 0.0, %v1691
    %1693 = vmatmul.f32.gmra.mxu0 %v1672
    %v1694 = vpop.f32.mrf.mxu0
    %v1695 = vadd.f32 0.0, %v1694
    %1696 = vdwg.mxu0
    %v1698 = vsel %vm1013, %v1656, 0
    %v1701 = vsel %vm1013, %v1657, 0
    %1703 = vmatpush.msra.mxu0 0.0
    %1704 = vmatpush.msra.mxu0 0.0
    %1705 = vmatpush.msra.mxu0 0.0
    %1706 = vmatpush.msra.mxu0 0.0
    %1707 = vmatpush.msra.mxu0 0.0
    %1708 = vmatpush.msra.mxu0 0.0
    %1709 = vmatpush.msra.mxu0 0.0
    %1710 = vmatpush.msra.mxu0 0.0
    %1711 = vmatpush.msra.mxu0 0.0
    %1712 = vmatpush.msra.mxu0 0.0
    %1713 = vmatpush.msra.mxu0 0.0
    %1714 = vmatpush.msra.mxu0 0.0
    %1715 = vmatpush.msra.mxu0 %v1661
    %1716 = vmatpush.msra.mxu0 %v1660
    %1717 = vmatpush.msra.mxu0 %v1659
    %1718 = vmatpush.msra.mxu0 %v1658
    %1719 = vmatmul.f32.gmra.mxu0 %v1698
    %v1720 = vpop.f32.mrf.mxu0
    %v1721 = vadd.f32 %v1692, %v1720
    %1722 = vmatmul.f32.gmra.mxu0 %v1701
    %v1723 = vpop.f32.mrf.mxu0
    %v1724 = vadd.f32 %v1695, %v1723
    %1725 = vdwg.mxu0
    %v1726 = vld [vmem:[%s7] sm:$0x1]
    %v1728 = vperm.slane %v1726, 0
    %v1730 = vadd.f32 %v1721, %v1728
    %v1731 = vadd.f32 %v1724, %v1728
    %1732 = vmax.xlane.f32.xlu0 %v1730
    %v1733 = vpop.xlane.xlu0 %1732
    %1734 = vmax.xlane.f32.xlu0 %v1731
    %v1735 = vpop.xlane.xlu0 %1734
    %v1736 = vsub.f32 %v1730, %v1733
    %v1737 = vsub.f32 %v1731, %v1735
    %v1738 = vmul.f32 %v1736, 1.442695
    %v1739 = vpow.pop %v1738
    %v1740 = vmul.f32 %v1737, 1.442695
    %v1741 = vpow.pop %v1740
    %1742 = vadd.xlane.f32.xlu0 %v1739
    %v1743 = vpop.xlane.xlu0 %1742
    %1744 = vadd.xlane.f32.xlu0 %v1741
    %v1745 = vpop.xlane.xlu0 %1744
    %v1746 = vlog2.pop %v1743
    %v1747 = vmul.f32 %v1746, 0.6931472
    %v1748 = vlog2.pop %v1745
    %v1749 = vmul.f32 %v1748, 0.6931472
    %v1750 = vsub.f32 %v1736, %v1747
    %v1751 = vsub.f32 %v1737, %v1749
    %v1754 = vrot.slane %v1750, 2
    %v1755 = vrot.slane %v1750, 4
    %v1756 = vrot.slane %v1750, 6
    %v1757 = vrot.slane %v1751, 2
    %v1758 = vrot.slane %v1751, 4
    %v1759 = vrot.slane %v1751, 6
    %1766 = vst [vmem:[#allocation4] sm:$0x3] %v1750
    %1767 = vst [vmem:[#allocation4 + $0x2] sm:$0x3] %v1754
    %1768 = vst [vmem:[#allocation4 + $0x4] sm:$0x3] %v1755
    %1769 = vst [vmem:[#allocation4 + $0x6] sm:$0x3] %v1756
    %1770 = vst [vmem:[#allocation4 + $0x8] sm:$0x3] %v1751
    %1771 = vst [vmem:[#allocation4 + $0xa] sm:$0x3] %v1757
    %1772 = vst [vmem:[#allocation4 + $0xc] sm:$0x3] %v1758
    %1773 = vst [vmem:[#allocation4 + $0xe] sm:$0x3] %v1759
    // Predicated region
    $region34: #{crnn_forward.1} parent=1 // pred_check
      _
    $region35: #{crnn_forward.1} parent=1 // pred_check_branch
      %1775 = sbr.rel (0) target = $region37
    $region36: #{crnn_forward.1} parent=1 // pred_region
      %1777 = vsyncadd [#allocation5], 0
      %s1778 = sshll.u32 [#allocation4], 4
      %s1779 = int_to_ptr.vmem [resolvable:$true] %s1778
      %s1780 = sshll.u32 %s8, 4
      %s1781 = int_to_ptr.hbm [resolvable:$true] %s1780
      %1786 = dma.vmem_to_hbm [thread:$0]  %s1779, 256, %s1781, [#allocation5], 32, 32, 2
    $region37: #{crnn_forward.1} parent=1 // pred_fallthru
      _
    // Predicated region
    $region38: #{crnn_forward.1} parent=1 // pred_check
      _
    $region39: #{crnn_forward.1} parent=1 // pred_check_branch
      %1788 = sbr.rel (0) target = $region41
    $region40: #{crnn_forward.1} parent=1 // pred_region
      %1790 = dma.done [#allocation5], 256
    $region41: #{crnn_forward.1} parent=1 // pred_fallthru
      _
    %1791 = vsyncpa [#allocation5], 1

</llo_original>
